<compile_context>
chip_gen: v5e
topology: v5e:2x2
jax: 0.10.0
libtpu: 0.0.40
codegen_flags: <defaults>
</compile_context>

<pallas_src>
import jax
import jax.numpy as jnp
import numpy as np
from jax import lax
from jax.experimental import pallas as pl
from jax.experimental.pallas import tpu as pltpu

# hyperparams (the PyTorch module reads these from a global `hyperparams` dict)
HYPERPARAMS = {
    "hidden_layer_size": 32,   # hidden_size
    "lstm_hidden_size": 32,    # gru_hidden_size
    "lstm_num_layers": 1,      # num_layers
}


def _mm(a, b):
    return jnp.dot(a, b, preferred_element_type=jnp.float32)


def dqn_gru_cnn_kernel(
    x_ref, w1e_ref, b1e_ref, w2e_ref, b2e_ref,
    wfc1_ref, bfc1_ref, wfc2_ref, bfc2_ref, wfc3_ref, bfc3_ref,
    wih_ref, whh_ref, bih_ref, bhh_ref, wout_ref, bout_ref, h0_ref,
    q_ref, hn_ref,
):
    S = x_ref.shape[0]
    GH = hn_ref.shape[1]
    bf16 = jnp.bfloat16

    # ---- conv1 + ReLU: one (S, L) @ (L, L*C1) bf16 MXU matmul, f32 accumulation.
    # h1 flat layout: index = l*C1 + c1 (position-major).
    x_bf = x_ref[...].astype(bf16)
    h1 = jnp.maximum(_mm(x_bf, w1e_ref[...]) + b1e_ref[...], 0.0)           # (S, L*C1) f32

    # ---- conv2 + MaxPool1d(2) + ReLU, fused:
    # one merged (S, L*C1) @ (L*C1, 2*Lp*C2) matmul (even|odd output-position
    # halves share the LHS), then a single full-vreg max of the two halves,
    # bias added once after the max, then relu (relu(max)+b commutes).
    h2 = _mm(h1.astype(bf16), w2e_ref[...])                                  # (S, 2*Lp*C2)
    half = h2.shape[1] // 2
    pooled = jnp.maximum(
        jnp.maximum(h2[:, :half], h2[:, half:]) + b2e_ref[...], 0.0)         # (S, Lp*C2)

    # ---- fc1, fc2, fc3 + ReLU (single f32 matmuls; fc1 K = Lp*C2 = 256)
    h = jnp.maximum(_mm(pooled, wfc1_ref[...]) + bfc1_ref[...], 0.0)
    h = jnp.maximum(_mm(h, wfc2_ref[...]) + bfc2_ref[...], 0.0)
    h = jnp.maximum(_mm(h, wfc3_ref[...]) + bfc3_ref[...], 0.0)              # (S, H)

    # ---- GRU (single layer, PyTorch gate order r,z,n); input projection hoisted
    # out of the serial recurrence; hidden states kept in vregs (no VMEM stores).
    gi_all = _mm(h, wih_ref[...]) + bih_ref[...]                             # (S, 3*GH)
    whh = whh_ref[...]                                                       # (GH, 3*GH)
    bhh = bhh_ref[...]                                                       # (1, 3*GH)

    ht = h0_ref[...]                                                         # (1, GH)
    hts = []
    for t in range(S):                                                       # static unroll; fine for S<=16
        gi = gi_all[t:t + 1, :]                                              # (1, 3*GH)
        gh = _mm(ht, whh) + bhh                                              # (1, 3*GH)
        rz = jax.nn.sigmoid(gi[:, :2 * GH] + gh[:, :2 * GH])                 # fused r/z EUP push
        r = rz[:, :GH]
        z = rz[:, GH:]
        n = jnp.tanh(gi[:, 2 * GH:] + r * gh[:, 2 * GH:])
        ht = n + z * (ht - n)                                                # == (1-z)*n + z*ht
        hts.append(ht)
    hn_ref[...] = ht

    # ---- batched output projection + single lane-dense (S, 128) store
    hseq = jnp.concatenate(hts, axis=0)                                      # (S, GH), stays in vregs
    q_ref[...] = _mm(hseq, wout_ref[...]) + bout_ref[...]                    # (S, 128-padded)


def prepare_params(params, state_dim):
    """One-time repacking of PyTorch-layout params into kernel layout (cache this)."""
    L = int(state_dim)
    assert L % 2 == 0, "MaxPool1d(2) flatten assumes even state_dim"
    Lp = L // 2
    f32 = np.float32

    w1 = np.asarray(params["conv1_w"], f32)          # (C1, 1, 3)
    w2 = np.asarray(params["conv2_w"], f32)          # (C2, C1, 3)
    assert w1.shape[2] == 3 and w2.shape[2] == 3, "Toeplitz expansion assumes kernel_size=3, padding=1"
    C1 = w1.shape[0]
    C2 = w2.shape[0]

    # conv1 zero-expanded weight: W1e[l', l*C1+c1] = w1[c1,0,k], l' = l+k-1
    W1e = np.zeros((L, L * C1), f32)
    for l in range(L):
        for k in range(3):
            lp = l + k - 1
            if 0 <= lp < L:
                W1e[lp, l * C1:(l + 1) * C1] = w1[:, 0, k]
    b1e = np.tile(np.asarray(params["conv1_b"], f32), L)[None, :]            # (1, L*C1)

    # conv2 zero-expanded weights, even|odd output-position halves merged into one
    # (L*C1, 2*Lp*C2) RHS so conv2 is a single matmul and the 2:1 maxpool is one
    # elementwise max of the two 128-aligned halves.  Output flat index = c2*Lp + p
    # (matches PyTorch's channel-major flatten, so fc1 needs no permutation).
    W2e = np.zeros((2, L * C1, Lp * C2), f32)
    for p in range(Lp):
        for parity in range(2):
            l = 2 * p + parity
            for k in range(3):
                lp = l + k - 1
                if 0 <= lp < L:
                    W2e[parity, lp * C1:(lp + 1) * C1, p::Lp] = w2[:, :, k].T
    W2e_merged = np.concatenate([W2e[0], W2e[1]], axis=1)                    # (L*C1, 2*Lp*C2)
    b2e = np.repeat(np.asarray(params["conv2_b"], f32), Lp)[None, :]         # (1, Lp*C2)

    # fc_output weight/bias padded to 128 lanes for an unmasked lane-dense q store
    wout = np.asarray(params["fc_out_w"], f32).T                             # (GH, A)
    bout = np.asarray(params["fc_out_b"], f32)[None, :]                      # (1, A)
    GH, A = wout.shape
    AP = 128
    wout_pad = np.zeros((GH, AP), f32); wout_pad[:, :A] = wout
    bout_pad = np.zeros((1, AP), f32);  bout_pad[:, :A] = bout

    bf16 = jnp.bfloat16
    return {
        # conv weights stored in bf16 (halves prologue DMA; f32 accumulation in kernel)
        "w1e": jnp.asarray(W1e, dtype=bf16), "b1e": jnp.asarray(b1e),
        "w2e": jnp.asarray(W2e_merged, dtype=bf16), "b2e": jnp.asarray(b2e),
        "wfc1": jnp.asarray(params["fc1_w"]).T, "bfc1": jnp.asarray(params["fc1_b"])[None, :],
        "wfc2": jnp.asarray(params["fc2_w"]).T, "bfc2": jnp.asarray(params["fc2_b"])[None, :],
        "wfc3": jnp.asarray(params["fc3_w"]).T, "bfc3": jnp.asarray(params["fc3_b"])[None, :],
        "wih": jnp.asarray(params["gru_wih"]).T, "whh": jnp.asarray(params["gru_whh"]).T,
        "bih": jnp.asarray(params["gru_bih"])[None, :], "bhh": jnp.asarray(params["gru_bhh"])[None, :],
        "wout": jnp.asarray(wout_pad), "bout": jnp.asarray(bout_pad),
        # shape carrier only (not fed to the kernel): true action_dim
        "bout_raw": jnp.asarray(bout),
    }


_WEIGHT_KEYS = ("w1e", "b1e", "w2e", "b2e", "wfc1", "bfc1", "wfc2", "bfc2",
                "wfc3", "bfc3", "wih", "whh", "bih", "bhh", "wout", "bout")


def dqn_gru_cnn_pallas_batched(xs, prep, h0s=None):
    """Batched forward: xs (B, S, L) -> (q (B, S, A), hn (B, 1, GH))."""
    B, S, L = xs.shape
    GH = prep["whh"].shape[0]
    AP = prep["wout"].shape[1]
    A = prep["bout_raw"].shape[1]
    f32 = jnp.float32

    if h0s is None:
        h0s = jnp.zeros((B, 1, GH), f32)
    else:
        h0s = h0s.reshape(B, 1, GH).astype(f32)

    def resident(arr):
        # Weight stays in VMEM across the whole batch grid (DMA'd once).
        nd = arr.ndim
        return pl.BlockSpec(arr.shape, lambda b, _n=nd: (0,) * _n)

    weights = [prep[k] for k in _WEIGHT_KEYS]

    in_specs = (
        [pl.BlockSpec((None, S, L), lambda b: (b, 0, 0))]          # x: one sequence per grid step
        + [resident(w) for w in weights]
        + [pl.BlockSpec((None, 1, GH), lambda b: (b, 0, 0))]       # h0
    )
    out_specs = (
        pl.BlockSpec((None, S, AP), lambda b: (b, 0, 0)),          # q (lane-dense 128-padded)
        pl.BlockSpec((None, 1, GH), lambda b: (b, 0, 0)),          # hn
    )

    q_pad, hn = pl.pallas_call(
        dqn_gru_cnn_kernel,
        grid=(B,),
        out_shape=(
            jax.ShapeDtypeStruct((B, S, AP), f32),
            jax.ShapeDtypeStruct((B, 1, GH), f32),
        ),
        in_specs=in_specs,
        out_specs=out_specs,
        compiler_params=pltpu.CompilerParams(
            dimension_semantics=("parallel",),   # shards sequences across TCs on v7x
        ),
    )(xs.astype(f32), *weights, h0s)

    return q_pad[:, :, :A], hn


def dqn_gru_cnn_pallas(x, prep, hidden_state=None):
    """Module-equivalent single-sequence forward: x (S, L) -> (q (S, A), hn (num_layers, 1, GH))."""
    S, L = x.shape
    GH = prep["whh"].shape[0]
    if hidden_state is None:
        h0 = jnp.zeros((1, 1, GH), jnp.float32)
    else:
        h0 = hidden_state.reshape(1, 1, GH).astype(jnp.float32)
    q, hn = dqn_gru_cnn_pallas_batched(x[None], prep, h0)
    return q[0], hn.reshape(HYPERPARAMS["lstm_num_layers"], 1, GH)


# ----------------------- pure-JAX reference (for checking) -----------------------
def reference_forward(x, p):
    S, L = x.shape
    x1 = x[:, None, :]
    out1 = lax.conv_general_dilated(x1, p["conv1_w"], (1,), "SAME",
                                    dimension_numbers=("NCH", "OIH", "NCH"))
    out1 = jax.nn.relu(out1 + p["conv1_b"][None, :, None])
    out2 = lax.conv_general_dilated(out1, p["conv2_w"], (1,), "SAME",
                                    dimension_numbers=("NCH", "OIH", "NCH"))
    out2 = jax.nn.relu(out2 + p["conv2_b"][None, :, None])
    pooled = out2.reshape(S, 32, L // 2, 2).max(axis=3)
    flat = pooled.reshape(S, -1)
    h = jax.nn.relu(flat @ p["fc1_w"].T + p["fc1_b"])
    h = jax.nn.relu(h @ p["fc2_w"].T + p["fc2_b"])
    h = jax.nn.relu(h @ p["fc3_w"].T + p["fc3_b"])
    GH = p["gru_whh"].shape[1]
    ht = jnp.zeros((GH,), jnp.float32)
    outs = []
    for t in range(S):
        gi = p["gru_wih"] @ h[t] + p["gru_bih"]
        gh = p["gru_whh"] @ ht + p["gru_bhh"]
        r = jax.nn.sigmoid(gi[:GH] + gh[:GH])
        z = jax.nn.sigmoid(gi[GH:2 * GH] + gh[GH:2 * GH])
        n = jnp.tanh(gi[2 * GH:] + r * gh[2 * GH:])
        ht = (1.0 - z) * n + z * ht
        outs.append(ht)
    gru_out = jnp.stack(outs)
    q = gru_out @ p["fc_out_w"].T + p["fc_out_b"]
    return q, ht[None, None, :]


def init_params(key, state_dim, action_dim):
    H = HYPERPARAMS["hidden_layer_size"]
    GH = HYPERPARAMS["lstm_hidden_size"]
    cnn_out = state_dim // 2 * 32

    def u(k, shape, fan_in):
        b = 1.0 / float(np.sqrt(fan_in))
        return jax.random.uniform(k, shape, jnp.float32, -b, b)

    ks = jax.random.split(key, 16)
    return {
        "conv1_w": u(ks[0], (16, 1, 3), 3),
        "conv1_b": u(ks[1], (16,), 3),
        "conv2_w": u(ks[2], (32, 16, 3), 48),
        "conv2_b": u(ks[3], (32,), 48),
        "fc1_w": u(ks[4], (H, cnn_out), cnn_out),
        "fc1_b": u(ks[5], (H,), cnn_out),
        "fc2_w": u(ks[6], (H, H), H),
        "fc2_b": u(ks[7], (H,), H),
        "fc3_w": u(ks[8], (H, H), H),
        "fc3_b": u(ks[9], (H,), H),
        "gru_wih": u(ks[10], (3 * GH, H), GH),
        "gru_whh": u(ks[11], (3 * GH, GH), GH),
        "gru_bih": u(ks[12], (3 * GH,), GH),
        "gru_bhh": u(ks[13], (3 * GH,), GH),
        "fc_out_w": u(ks[14], (action_dim, GH), GH),
        "fc_out_b": u(ks[15], (action_dim,), GH),
    }


if __name__ == "__main__":
    seq_len, state_dim, action_dim, batch = 8, 16, 4, 4

    key = jax.random.PRNGKey(0)
    kp, kx = jax.random.split(key)
    params = init_params(kp, state_dim, action_dim)
    xb = jax.random.normal(kx, (batch, seq_len, state_dim), jnp.float32)

    # one-time, cached weight repacking (kept out of the per-call hot path)
    prep = prepare_params(params, state_dim)

    # batched path: grid=(B,), weights resident, "parallel" batch axis
    fwd_batched = jax.jit(dqn_gru_cnn_pallas_batched)
    qb, hnb = fwd_batched(xb, prep)
    jax.block_until_ready((qb, hnb))

    # module-equivalent single-sequence path
    fwd = jax.jit(lambda x, prep: dqn_gru_cnn_pallas(x, prep))
    q0, hn0 = fwd(xb[0], prep)
    jax.block_until_ready((q0, hn0))

    # correctness vs pure-JAX reference (tolerance bounded by bf16 conv weights)
    for b in range(batch):
        q_ref, hn_ref = reference_forward(xb[b], params)
        np.testing.assert_allclose(np.asarray(qb[b]), np.asarray(q_ref), rtol=1e-2, atol=1e-2)
        np.testing.assert_allclose(np.asarray(hnb[b]), np.asarray(hn_ref[0]), rtol=1e-2, atol=1e-2)

    # single-sequence path agrees with batched path and has the module's output shapes
    np.testing.assert_allclose(np.asarray(q0), np.asarray(qb[0]), rtol=1e-5, atol=1e-5)
    assert qb.shape == (batch, seq_len, action_dim)
    assert hnb.shape == (batch, 1, HYPERPARAMS["lstm_hidden_size"])
    assert q0.shape == (seq_len, action_dim)
    assert hn0.shape == (HYPERPARAMS["lstm_num_layers"], 1, HYPERPARAMS["lstm_hidden_size"])

    print("KERNEL_OK")
</pallas_src>

<mosaic_0001>
module attributes {stable_mosaic.version = 11 : i64} {
  func.func @dqn_gru_cnn_kernel(%arg0: i32, %arg1: memref<1x8x16xf32, #tpu.memory_space<vmem>>, %arg2: memref<16x256xbf16, #tpu.memory_space<vmem>>, %arg3: memref<1x256xf32, #tpu.memory_space<vmem>>, %arg4: memref<256x512xbf16, #tpu.memory_space<vmem>>, %arg5: memref<1x256xf32, #tpu.memory_space<vmem>>, %arg6: memref<256x32xf32, #tpu.memory_space<vmem>>, %arg7: memref<1x32xf32, #tpu.memory_space<vmem>>, %arg8: memref<32x32xf32, #tpu.memory_space<vmem>>, %arg9: memref<1x32xf32, #tpu.memory_space<vmem>>, %arg10: memref<32x32xf32, #tpu.memory_space<vmem>>, %arg11: memref<1x32xf32, #tpu.memory_space<vmem>>, %arg12: memref<32x96xf32, #tpu.memory_space<vmem>>, %arg13: memref<32x96xf32, #tpu.memory_space<vmem>>, %arg14: memref<1x96xf32, #tpu.memory_space<vmem>>, %arg15: memref<1x96xf32, #tpu.memory_space<vmem>>, %arg16: memref<32x128xf32, #tpu.memory_space<vmem>>, %arg17: memref<1x128xf32, #tpu.memory_space<vmem>>, %arg18: memref<1x1x32xf32, #tpu.memory_space<vmem>>, %arg19: memref<1x8x128xf32, #tpu.memory_space<vmem>>, %arg20: memref<1x1x32xf32, #tpu.memory_space<vmem>>) attributes {dimension_semantics = [#tpu.dimension_semantics<parallel>], iteration_bounds = array<i64: 4>, scalar_prefetch = 0 : i64, scratch_operands = 0 : i64, tpu.core_type = #tpu.core_type<tc>, window_params = [{transform_indices = @transform_0, window_bounds = array<i64: 1, 8, 16>}, {pipeline_mode = #tpu.pipeline_mode<synchronous>, transform_indices = @transform_1, window_bounds = array<i64: 16, 256>}, {pipeline_mode = #tpu.pipeline_mode<synchronous>, transform_indices = @transform_2, window_bounds = array<i64: 1, 256>}, {pipeline_mode = #tpu.pipeline_mode<synchronous>, transform_indices = @transform_3, window_bounds = array<i64: 256, 512>}, {pipeline_mode = #tpu.pipeline_mode<synchronous>, transform_indices = @transform_4, window_bounds = array<i64: 1, 256>}, {pipeline_mode = #tpu.pipeline_mode<synchronous>, transform_indices = @transform_5, window_bounds = array<i64: 256, 32>}, {pipeline_mode = #tpu.pipeline_mode<synchronous>, transform_indices = @transform_6, window_bounds = array<i64: 1, 32>}, {pipeline_mode = #tpu.pipeline_mode<synchronous>, transform_indices = @transform_7, window_bounds = array<i64: 32, 32>}, {pipeline_mode = #tpu.pipeline_mode<synchronous>, transform_indices = @transform_8, window_bounds = array<i64: 1, 32>}, {pipeline_mode = #tpu.pipeline_mode<synchronous>, transform_indices = @transform_9, window_bounds = array<i64: 32, 32>}, {pipeline_mode = #tpu.pipeline_mode<synchronous>, transform_indices = @transform_10, window_bounds = array<i64: 1, 32>}, {pipeline_mode = #tpu.pipeline_mode<synchronous>, transform_indices = @transform_11, window_bounds = array<i64: 32, 96>}, {pipeline_mode = #tpu.pipeline_mode<synchronous>, transform_indices = @transform_12, window_bounds = array<i64: 32, 96>}, {pipeline_mode = #tpu.pipeline_mode<synchronous>, transform_indices = @transform_13, window_bounds = array<i64: 1, 96>}, {pipeline_mode = #tpu.pipeline_mode<synchronous>, transform_indices = @transform_14, window_bounds = array<i64: 1, 96>}, {pipeline_mode = #tpu.pipeline_mode<synchronous>, transform_indices = @transform_15, window_bounds = array<i64: 32, 128>}, {pipeline_mode = #tpu.pipeline_mode<synchronous>, transform_indices = @transform_16, window_bounds = array<i64: 1, 128>}, {transform_indices = @transform_17, window_bounds = array<i64: 1, 1, 32>}, {transform_indices = @transform_18, window_bounds = array<i64: 1, 8, 128>}, {transform_indices = @transform_19, window_bounds = array<i64: 1, 1, 32>}]} {
    %c0 = arith.constant 0 : index
    %c0_0 = arith.constant 0 : index
    %c0_1 = arith.constant 0 : index
    %0 = vector.load %arg1[%c0, %c0_0, %c0_1] : memref<1x8x16xf32, #tpu.memory_space<vmem>>, vector<1x8x16xf32>
    %1 = vector.shape_cast %0 : vector<1x8x16xf32> to vector<8x16xf32>
    %2 = arith.truncf %1 : vector<8x16xf32> to vector<8x16xbf16>
    %c0_2 = arith.constant 0 : index
    %c0_3 = arith.constant 0 : index
    %3 = vector.load %arg2[%c0_2, %c0_3] : memref<16x256xbf16, #tpu.memory_space<vmem>>, vector<16x256xbf16>
    %cst = arith.constant dense<0.000000e+00> : vector<8x256xf32>
    %4 = tpu.matmul %2, %3, %cst {dimension_numbers = #tpu.dot_dimension_numbers<[1], [0], [0], [1], [0, 0, 1, 1], [], []>} : vector<8x16xbf16>, vector<16x256xbf16>, vector<8x256xf32> -> vector<8x256xf32>
    %c0_4 = arith.constant 0 : index
    %c0_5 = arith.constant 0 : index
    %5 = vector.load %arg3[%c0_4, %c0_5] : memref<1x256xf32, #tpu.memory_space<vmem>>, vector<1x256xf32>
    %6 = vector.broadcast %5 : vector<1x256xf32> to vector<8x256xf32>
    %7 = arith.addf %4, %6 : vector<8x256xf32>
    %cst_6 = arith.constant 0.000000e+00 : f32
    %8 = vector.broadcast %cst_6 : f32 to vector<8x256xf32>
    %9 = arith.maximumf %7, %8 : vector<8x256xf32>
    %10 = arith.truncf %9 : vector<8x256xf32> to vector<8x256xbf16>
    %c0_7 = arith.constant 0 : index
    %c0_8 = arith.constant 0 : index
    %11 = vector.load %arg4[%c0_7, %c0_8] : memref<256x512xbf16, #tpu.memory_space<vmem>>, vector<256x512xbf16>
    %cst_9 = arith.constant dense<0.000000e+00> : vector<8x512xf32>
    %12 = tpu.matmul %10, %11, %cst_9 {dimension_numbers = #tpu.dot_dimension_numbers<[1], [0], [0], [1], [0, 0, 1, 1], [], []>} : vector<8x256xbf16>, vector<256x512xbf16>, vector<8x512xf32> -> vector<8x512xf32>
    %13 = vector.extract_strided_slice %12 {offsets = [0, 0], sizes = [8, 256], strides = [1, 1]} : vector<8x512xf32> to vector<8x256xf32>
    %14 = vector.extract_strided_slice %12 {offsets = [0, 256], sizes = [8, 256], strides = [1, 1]} : vector<8x512xf32> to vector<8x256xf32>
    %15 = arith.maximumf %13, %14 : vector<8x256xf32>
    %c0_10 = arith.constant 0 : index
    %c0_11 = arith.constant 0 : index
    %16 = vector.load %arg5[%c0_10, %c0_11] : memref<1x256xf32, #tpu.memory_space<vmem>>, vector<1x256xf32>
    %17 = vector.broadcast %16 : vector<1x256xf32> to vector<8x256xf32>
    %18 = arith.addf %15, %17 : vector<8x256xf32>
    %cst_12 = arith.constant 0.000000e+00 : f32
    %19 = vector.broadcast %cst_12 : f32 to vector<8x256xf32>
    %20 = arith.maximumf %18, %19 : vector<8x256xf32>
    %c0_13 = arith.constant 0 : index
    %c0_14 = arith.constant 0 : index
    %21 = vector.load %arg6[%c0_13, %c0_14] : memref<256x32xf32, #tpu.memory_space<vmem>>, vector<256x32xf32>
    %cst_15 = arith.constant dense<0.000000e+00> : vector<8x32xf32>
    %22 = tpu.matmul %20, %21, %cst_15 {dimension_numbers = #tpu.dot_dimension_numbers<[1], [0], [0], [1], [0, 0, 1, 1], [], []>} : vector<8x256xf32>, vector<256x32xf32>, vector<8x32xf32> -> vector<8x32xf32>
    %c0_16 = arith.constant 0 : index
    %c0_17 = arith.constant 0 : index
    %23 = vector.load %arg7[%c0_16, %c0_17] : memref<1x32xf32, #tpu.memory_space<vmem>>, vector<1x32xf32>
    %24 = vector.broadcast %23 : vector<1x32xf32> to vector<8x32xf32>
    %25 = arith.addf %22, %24 : vector<8x32xf32>
    %cst_18 = arith.constant 0.000000e+00 : f32
    %26 = vector.broadcast %cst_18 : f32 to vector<8x32xf32>
    %27 = arith.maximumf %25, %26 : vector<8x32xf32>
    %c0_19 = arith.constant 0 : index
    %c0_20 = arith.constant 0 : index
    %28 = vector.load %arg8[%c0_19, %c0_20] : memref<32x32xf32, #tpu.memory_space<vmem>>, vector<32x32xf32>
    %cst_21 = arith.constant dense<0.000000e+00> : vector<8x32xf32>
    %29 = tpu.matmul %27, %28, %cst_21 {dimension_numbers = #tpu.dot_dimension_numbers<[1], [0], [0], [1], [0, 0, 1, 1], [], []>} : vector<8x32xf32>, vector<32x32xf32>, vector<8x32xf32> -> vector<8x32xf32>
    %c0_22 = arith.constant 0 : index
    %c0_23 = arith.constant 0 : index
    %30 = vector.load %arg9[%c0_22, %c0_23] : memref<1x32xf32, #tpu.memory_space<vmem>>, vector<1x32xf32>
    %31 = vector.broadcast %30 : vector<1x32xf32> to vector<8x32xf32>
    %32 = arith.addf %29, %31 : vector<8x32xf32>
    %cst_24 = arith.constant 0.000000e+00 : f32
    %33 = vector.broadcast %cst_24 : f32 to vector<8x32xf32>
    %34 = arith.maximumf %32, %33 : vector<8x32xf32>
    %c0_25 = arith.constant 0 : index
    %c0_26 = arith.constant 0 : index
    %35 = vector.load %arg10[%c0_25, %c0_26] : memref<32x32xf32, #tpu.memory_space<vmem>>, vector<32x32xf32>
    %cst_27 = arith.constant dense<0.000000e+00> : vector<8x32xf32>
    %36 = tpu.matmul %34, %35, %cst_27 {dimension_numbers = #tpu.dot_dimension_numbers<[1], [0], [0], [1], [0, 0, 1, 1], [], []>} : vector<8x32xf32>, vector<32x32xf32>, vector<8x32xf32> -> vector<8x32xf32>
    %c0_28 = arith.constant 0 : index
    %c0_29 = arith.constant 0 : index
    %37 = vector.load %arg11[%c0_28, %c0_29] : memref<1x32xf32, #tpu.memory_space<vmem>>, vector<1x32xf32>
    %38 = vector.broadcast %37 : vector<1x32xf32> to vector<8x32xf32>
    %39 = arith.addf %36, %38 : vector<8x32xf32>
    %cst_30 = arith.constant 0.000000e+00 : f32
    %40 = vector.broadcast %cst_30 : f32 to vector<8x32xf32>
    %41 = arith.maximumf %39, %40 : vector<8x32xf32>
    %c0_31 = arith.constant 0 : index
    %c0_32 = arith.constant 0 : index
    %42 = vector.load %arg12[%c0_31, %c0_32] : memref<32x96xf32, #tpu.memory_space<vmem>>, vector<32x96xf32>
    %cst_33 = arith.constant dense<0.000000e+00> : vector<8x96xf32>
    %43 = tpu.matmul %41, %42, %cst_33 {dimension_numbers = #tpu.dot_dimension_numbers<[1], [0], [0], [1], [0, 0, 1, 1], [], []>} : vector<8x32xf32>, vector<32x96xf32>, vector<8x96xf32> -> vector<8x96xf32>
    %c0_34 = arith.constant 0 : index
    %c0_35 = arith.constant 0 : index
    %44 = vector.load %arg14[%c0_34, %c0_35] : memref<1x96xf32, #tpu.memory_space<vmem>>, vector<1x96xf32>
    %45 = vector.broadcast %44 : vector<1x96xf32> to vector<8x96xf32>
    %46 = arith.addf %43, %45 : vector<8x96xf32>
    %c0_36 = arith.constant 0 : index
    %c0_37 = arith.constant 0 : index
    %47 = vector.load %arg13[%c0_36, %c0_37] : memref<32x96xf32, #tpu.memory_space<vmem>>, vector<32x96xf32>
    %c0_38 = arith.constant 0 : index
    %c0_39 = arith.constant 0 : index
    %48 = vector.load %arg15[%c0_38, %c0_39] : memref<1x96xf32, #tpu.memory_space<vmem>>, vector<1x96xf32>
    %c0_40 = arith.constant 0 : index
    %c0_41 = arith.constant 0 : index
    %c0_42 = arith.constant 0 : index
    %49 = vector.load %arg18[%c0_40, %c0_41, %c0_42] : memref<1x1x32xf32, #tpu.memory_space<vmem>>, vector<1x1x32xf32>
    %50 = vector.shape_cast %49 : vector<1x1x32xf32> to vector<1x32xf32>
    %51 = vector.extract_strided_slice %46 {offsets = [0, 0], sizes = [1, 96], strides = [1, 1]} : vector<8x96xf32> to vector<1x96xf32>
    %cst_43 = arith.constant dense<0.000000e+00> : vector<1x96xf32>
    %52 = tpu.matmul %50, %47, %cst_43 {dimension_numbers = #tpu.dot_dimension_numbers<[1], [0], [0], [1], [0, 0, 1, 1], [], []>} : vector<1x32xf32>, vector<32x96xf32>, vector<1x96xf32> -> vector<1x96xf32>
    %53 = arith.addf %52, %48 : vector<1x96xf32>
    %54 = vector.extract_strided_slice %51 {offsets = [0, 0], sizes = [1, 64], strides = [1, 1]} : vector<1x96xf32> to vector<1x64xf32>
    %55 = vector.extract_strided_slice %53 {offsets = [0, 0], sizes = [1, 64], strides = [1, 1]} : vector<1x96xf32> to vector<1x64xf32>
    %56 = arith.addf %54, %55 : vector<1x64xf32>
    %57 = arith.negf %56 : vector<1x64xf32>
    %58 = math.exp %57 : vector<1x64xf32>
    %cst_44 = arith.constant 1.000000e+00 : f32
    %59 = vector.broadcast %cst_44 : f32 to vector<1x64xf32>
    %60 = arith.addf %59, %58 : vector<1x64xf32>
    %61 = arith.divf %59, %60 : vector<1x64xf32>
    %62 = vector.extract_strided_slice %61 {offsets = [0, 0], sizes = [1, 32], strides = [1, 1]} : vector<1x64xf32> to vector<1x32xf32>
    %63 = vector.extract_strided_slice %61 {offsets = [0, 32], sizes = [1, 32], strides = [1, 1]} : vector<1x64xf32> to vector<1x32xf32>
    %64 = vector.extract_strided_slice %51 {offsets = [0, 64], sizes = [1, 32], strides = [1, 1]} : vector<1x96xf32> to vector<1x32xf32>
    %65 = vector.extract_strided_slice %53 {offsets = [0, 64], sizes = [1, 32], strides = [1, 1]} : vector<1x96xf32> to vector<1x32xf32>
    %66 = arith.mulf %62, %65 : vector<1x32xf32>
    %67 = arith.addf %64, %66 : vector<1x32xf32>
    %68 = math.tanh %67 : vector<1x32xf32>
    %69 = arith.subf %50, %68 : vector<1x32xf32>
    %70 = arith.mulf %63, %69 : vector<1x32xf32>
    %71 = arith.addf %68, %70 : vector<1x32xf32>
    %72 = vector.extract_strided_slice %46 {offsets = [1, 0], sizes = [1, 96], strides = [1, 1]} : vector<8x96xf32> to vector<1x96xf32>
    %cst_45 = arith.constant dense<0.000000e+00> : vector<1x96xf32>
    %73 = tpu.matmul %71, %47, %cst_45 {dimension_numbers = #tpu.dot_dimension_numbers<[1], [0], [0], [1], [0, 0, 1, 1], [], []>} : vector<1x32xf32>, vector<32x96xf32>, vector<1x96xf32> -> vector<1x96xf32>
    %74 = arith.addf %73, %48 : vector<1x96xf32>
    %75 = vector.extract_strided_slice %72 {offsets = [0, 0], sizes = [1, 64], strides = [1, 1]} : vector<1x96xf32> to vector<1x64xf32>
    %76 = vector.extract_strided_slice %74 {offsets = [0, 0], sizes = [1, 64], strides = [1, 1]} : vector<1x96xf32> to vector<1x64xf32>
    %77 = arith.addf %75, %76 : vector<1x64xf32>
    %78 = arith.negf %77 : vector<1x64xf32>
    %79 = math.exp %78 : vector<1x64xf32>
    %cst_46 = arith.constant 1.000000e+00 : f32
    %80 = vector.broadcast %cst_46 : f32 to vector<1x64xf32>
    %81 = arith.addf %80, %79 : vector<1x64xf32>
    %82 = arith.divf %80, %81 : vector<1x64xf32>
    %83 = vector.extract_strided_slice %82 {offsets = [0, 0], sizes = [1, 32], strides = [1, 1]} : vector<1x64xf32> to vector<1x32xf32>
    %84 = vector.extract_strided_slice %82 {offsets = [0, 32], sizes = [1, 32], strides = [1, 1]} : vector<1x64xf32> to vector<1x32xf32>
    %85 = vector.extract_strided_slice %72 {offsets = [0, 64], sizes = [1, 32], strides = [1, 1]} : vector<1x96xf32> to vector<1x32xf32>
    %86 = vector.extract_strided_slice %74 {offsets = [0, 64], sizes = [1, 32], strides = [1, 1]} : vector<1x96xf32> to vector<1x32xf32>
    %87 = arith.mulf %83, %86 : vector<1x32xf32>
    %88 = arith.addf %85, %87 : vector<1x32xf32>
    %89 = math.tanh %88 : vector<1x32xf32>
    %90 = arith.subf %71, %89 : vector<1x32xf32>
    %91 = arith.mulf %84, %90 : vector<1x32xf32>
    %92 = arith.addf %89, %91 : vector<1x32xf32>
    %93 = vector.extract_strided_slice %46 {offsets = [2, 0], sizes = [1, 96], strides = [1, 1]} : vector<8x96xf32> to vector<1x96xf32>
    %cst_47 = arith.constant dense<0.000000e+00> : vector<1x96xf32>
    %94 = tpu.matmul %92, %47, %cst_47 {dimension_numbers = #tpu.dot_dimension_numbers<[1], [0], [0], [1], [0, 0, 1, 1], [], []>} : vector<1x32xf32>, vector<32x96xf32>, vector<1x96xf32> -> vector<1x96xf32>
    %95 = arith.addf %94, %48 : vector<1x96xf32>
    %96 = vector.extract_strided_slice %93 {offsets = [0, 0], sizes = [1, 64], strides = [1, 1]} : vector<1x96xf32> to vector<1x64xf32>
    %97 = vector.extract_strided_slice %95 {offsets = [0, 0], sizes = [1, 64], strides = [1, 1]} : vector<1x96xf32> to vector<1x64xf32>
    %98 = arith.addf %96, %97 : vector<1x64xf32>
    %99 = arith.negf %98 : vector<1x64xf32>
    %100 = math.exp %99 : vector<1x64xf32>
    %cst_48 = arith.constant 1.000000e+00 : f32
    %101 = vector.broadcast %cst_48 : f32 to vector<1x64xf32>
    %102 = arith.addf %101, %100 : vector<1x64xf32>
    %103 = arith.divf %101, %102 : vector<1x64xf32>
    %104 = vector.extract_strided_slice %103 {offsets = [0, 0], sizes = [1, 32], strides = [1, 1]} : vector<1x64xf32> to vector<1x32xf32>
    %105 = vector.extract_strided_slice %103 {offsets = [0, 32], sizes = [1, 32], strides = [1, 1]} : vector<1x64xf32> to vector<1x32xf32>
    %106 = vector.extract_strided_slice %93 {offsets = [0, 64], sizes = [1, 32], strides = [1, 1]} : vector<1x96xf32> to vector<1x32xf32>
    %107 = vector.extract_strided_slice %95 {offsets = [0, 64], sizes = [1, 32], strides = [1, 1]} : vector<1x96xf32> to vector<1x32xf32>
    %108 = arith.mulf %104, %107 : vector<1x32xf32>
    %109 = arith.addf %106, %108 : vector<1x32xf32>
    %110 = math.tanh %109 : vector<1x32xf32>
    %111 = arith.subf %92, %110 : vector<1x32xf32>
    %112 = arith.mulf %105, %111 : vector<1x32xf32>
    %113 = arith.addf %110, %112 : vector<1x32xf32>
    %114 = vector.extract_strided_slice %46 {offsets = [3, 0], sizes = [1, 96], strides = [1, 1]} : vector<8x96xf32> to vector<1x96xf32>
    %cst_49 = arith.constant dense<0.000000e+00> : vector<1x96xf32>
    %115 = tpu.matmul %113, %47, %cst_49 {dimension_numbers = #tpu.dot_dimension_numbers<[1], [0], [0], [1], [0, 0, 1, 1], [], []>} : vector<1x32xf32>, vector<32x96xf32>, vector<1x96xf32> -> vector<1x96xf32>
    %116 = arith.addf %115, %48 : vector<1x96xf32>
    %117 = vector.extract_strided_slice %114 {offsets = [0, 0], sizes = [1, 64], strides = [1, 1]} : vector<1x96xf32> to vector<1x64xf32>
    %118 = vector.extract_strided_slice %116 {offsets = [0, 0], sizes = [1, 64], strides = [1, 1]} : vector<1x96xf32> to vector<1x64xf32>
    %119 = arith.addf %117, %118 : vector<1x64xf32>
    %120 = arith.negf %119 : vector<1x64xf32>
    %121 = math.exp %120 : vector<1x64xf32>
    %cst_50 = arith.constant 1.000000e+00 : f32
    %122 = vector.broadcast %cst_50 : f32 to vector<1x64xf32>
    %123 = arith.addf %122, %121 : vector<1x64xf32>
    %124 = arith.divf %122, %123 : vector<1x64xf32>
    %125 = vector.extract_strided_slice %124 {offsets = [0, 0], sizes = [1, 32], strides = [1, 1]} : vector<1x64xf32> to vector<1x32xf32>
    %126 = vector.extract_strided_slice %124 {offsets = [0, 32], sizes = [1, 32], strides = [1, 1]} : vector<1x64xf32> to vector<1x32xf32>
    %127 = vector.extract_strided_slice %114 {offsets = [0, 64], sizes = [1, 32], strides = [1, 1]} : vector<1x96xf32> to vector<1x32xf32>
    %128 = vector.extract_strided_slice %116 {offsets = [0, 64], sizes = [1, 32], strides = [1, 1]} : vector<1x96xf32> to vector<1x32xf32>
    %129 = arith.mulf %125, %128 : vector<1x32xf32>
    %130 = arith.addf %127, %129 : vector<1x32xf32>
    %131 = math.tanh %130 : vector<1x32xf32>
    %132 = arith.subf %113, %131 : vector<1x32xf32>
    %133 = arith.mulf %126, %132 : vector<1x32xf32>
    %134 = arith.addf %131, %133 : vector<1x32xf32>
    %135 = vector.extract_strided_slice %46 {offsets = [4, 0], sizes = [1, 96], strides = [1, 1]} : vector<8x96xf32> to vector<1x96xf32>
    %cst_51 = arith.constant dense<0.000000e+00> : vector<1x96xf32>
    %136 = tpu.matmul %134, %47, %cst_51 {dimension_numbers = #tpu.dot_dimension_numbers<[1], [0], [0], [1], [0, 0, 1, 1], [], []>} : vector<1x32xf32>, vector<32x96xf32>, vector<1x96xf32> -> vector<1x96xf32>
    %137 = arith.addf %136, %48 : vector<1x96xf32>
    %138 = vector.extract_strided_slice %135 {offsets = [0, 0], sizes = [1, 64], strides = [1, 1]} : vector<1x96xf32> to vector<1x64xf32>
    %139 = vector.extract_strided_slice %137 {offsets = [0, 0], sizes = [1, 64], strides = [1, 1]} : vector<1x96xf32> to vector<1x64xf32>
    %140 = arith.addf %138, %139 : vector<1x64xf32>
    %141 = arith.negf %140 : vector<1x64xf32>
    %142 = math.exp %141 : vector<1x64xf32>
    %cst_52 = arith.constant 1.000000e+00 : f32
    %143 = vector.broadcast %cst_52 : f32 to vector<1x64xf32>
    %144 = arith.addf %143, %142 : vector<1x64xf32>
    %145 = arith.divf %143, %144 : vector<1x64xf32>
    %146 = vector.extract_strided_slice %145 {offsets = [0, 0], sizes = [1, 32], strides = [1, 1]} : vector<1x64xf32> to vector<1x32xf32>
    %147 = vector.extract_strided_slice %145 {offsets = [0, 32], sizes = [1, 32], strides = [1, 1]} : vector<1x64xf32> to vector<1x32xf32>
    %148 = vector.extract_strided_slice %135 {offsets = [0, 64], sizes = [1, 32], strides = [1, 1]} : vector<1x96xf32> to vector<1x32xf32>
    %149 = vector.extract_strided_slice %137 {offsets = [0, 64], sizes = [1, 32], strides = [1, 1]} : vector<1x96xf32> to vector<1x32xf32>
    %150 = arith.mulf %146, %149 : vector<1x32xf32>
    %151 = arith.addf %148, %150 : vector<1x32xf32>
    %152 = math.tanh %151 : vector<1x32xf32>
    %153 = arith.subf %134, %152 : vector<1x32xf32>
    %154 = arith.mulf %147, %153 : vector<1x32xf32>
    %155 = arith.addf %152, %154 : vector<1x32xf32>
    %156 = vector.extract_strided_slice %46 {offsets = [5, 0], sizes = [1, 96], strides = [1, 1]} : vector<8x96xf32> to vector<1x96xf32>
    %cst_53 = arith.constant dense<0.000000e+00> : vector<1x96xf32>
    %157 = tpu.matmul %155, %47, %cst_53 {dimension_numbers = #tpu.dot_dimension_numbers<[1], [0], [0], [1], [0, 0, 1, 1], [], []>} : vector<1x32xf32>, vector<32x96xf32>, vector<1x96xf32> -> vector<1x96xf32>
    %158 = arith.addf %157, %48 : vector<1x96xf32>
    %159 = vector.extract_strided_slice %156 {offsets = [0, 0], sizes = [1, 64], strides = [1, 1]} : vector<1x96xf32> to vector<1x64xf32>
    %160 = vector.extract_strided_slice %158 {offsets = [0, 0], sizes = [1, 64], strides = [1, 1]} : vector<1x96xf32> to vector<1x64xf32>
    %161 = arith.addf %159, %160 : vector<1x64xf32>
    %162 = arith.negf %161 : vector<1x64xf32>
    %163 = math.exp %162 : vector<1x64xf32>
    %cst_54 = arith.constant 1.000000e+00 : f32
    %164 = vector.broadcast %cst_54 : f32 to vector<1x64xf32>
    %165 = arith.addf %164, %163 : vector<1x64xf32>
    %166 = arith.divf %164, %165 : vector<1x64xf32>
    %167 = vector.extract_strided_slice %166 {offsets = [0, 0], sizes = [1, 32], strides = [1, 1]} : vector<1x64xf32> to vector<1x32xf32>
    %168 = vector.extract_strided_slice %166 {offsets = [0, 32], sizes = [1, 32], strides = [1, 1]} : vector<1x64xf32> to vector<1x32xf32>
    %169 = vector.extract_strided_slice %156 {offsets = [0, 64], sizes = [1, 32], strides = [1, 1]} : vector<1x96xf32> to vector<1x32xf32>
    %170 = vector.extract_strided_slice %158 {offsets = [0, 64], sizes = [1, 32], strides = [1, 1]} : vector<1x96xf32> to vector<1x32xf32>
    %171 = arith.mulf %167, %170 : vector<1x32xf32>
    %172 = arith.addf %169, %171 : vector<1x32xf32>
    %173 = math.tanh %172 : vector<1x32xf32>
    %174 = arith.subf %155, %173 : vector<1x32xf32>
    %175 = arith.mulf %168, %174 : vector<1x32xf32>
    %176 = arith.addf %173, %175 : vector<1x32xf32>
    %177 = vector.extract_strided_slice %46 {offsets = [6, 0], sizes = [1, 96], strides = [1, 1]} : vector<8x96xf32> to vector<1x96xf32>
    %cst_55 = arith.constant dense<0.000000e+00> : vector<1x96xf32>
    %178 = tpu.matmul %176, %47, %cst_55 {dimension_numbers = #tpu.dot_dimension_numbers<[1], [0], [0], [1], [0, 0, 1, 1], [], []>} : vector<1x32xf32>, vector<32x96xf32>, vector<1x96xf32> -> vector<1x96xf32>
    %179 = arith.addf %178, %48 : vector<1x96xf32>
    %180 = vector.extract_strided_slice %177 {offsets = [0, 0], sizes = [1, 64], strides = [1, 1]} : vector<1x96xf32> to vector<1x64xf32>
    %181 = vector.extract_strided_slice %179 {offsets = [0, 0], sizes = [1, 64], strides = [1, 1]} : vector<1x96xf32> to vector<1x64xf32>
    %182 = arith.addf %180, %181 : vector<1x64xf32>
    %183 = arith.negf %182 : vector<1x64xf32>
    %184 = math.exp %183 : vector<1x64xf32>
    %cst_56 = arith.constant 1.000000e+00 : f32
    %185 = vector.broadcast %cst_56 : f32 to vector<1x64xf32>
    %186 = arith.addf %185, %184 : vector<1x64xf32>
    %187 = arith.divf %185, %186 : vector<1x64xf32>
    %188 = vector.extract_strided_slice %187 {offsets = [0, 0], sizes = [1, 32], strides = [1, 1]} : vector<1x64xf32> to vector<1x32xf32>
    %189 = vector.extract_strided_slice %187 {offsets = [0, 32], sizes = [1, 32], strides = [1, 1]} : vector<1x64xf32> to vector<1x32xf32>
    %190 = vector.extract_strided_slice %177 {offsets = [0, 64], sizes = [1, 32], strides = [1, 1]} : vector<1x96xf32> to vector<1x32xf32>
    %191 = vector.extract_strided_slice %179 {offsets = [0, 64], sizes = [1, 32], strides = [1, 1]} : vector<1x96xf32> to vector<1x32xf32>
    %192 = arith.mulf %188, %191 : vector<1x32xf32>
    %193 = arith.addf %190, %192 : vector<1x32xf32>
    %194 = math.tanh %193 : vector<1x32xf32>
    %195 = arith.subf %176, %194 : vector<1x32xf32>
    %196 = arith.mulf %189, %195 : vector<1x32xf32>
    %197 = arith.addf %194, %196 : vector<1x32xf32>
    %198 = vector.extract_strided_slice %46 {offsets = [7, 0], sizes = [1, 96], strides = [1, 1]} : vector<8x96xf32> to vector<1x96xf32>
    %cst_57 = arith.constant dense<0.000000e+00> : vector<1x96xf32>
    %199 = tpu.matmul %197, %47, %cst_57 {dimension_numbers = #tpu.dot_dimension_numbers<[1], [0], [0], [1], [0, 0, 1, 1], [], []>} : vector<1x32xf32>, vector<32x96xf32>, vector<1x96xf32> -> vector<1x96xf32>
    %200 = arith.addf %199, %48 : vector<1x96xf32>
    %201 = vector.extract_strided_slice %198 {offsets = [0, 0], sizes = [1, 64], strides = [1, 1]} : vector<1x96xf32> to vector<1x64xf32>
    %202 = vector.extract_strided_slice %200 {offsets = [0, 0], sizes = [1, 64], strides = [1, 1]} : vector<1x96xf32> to vector<1x64xf32>
    %203 = arith.addf %201, %202 : vector<1x64xf32>
    %204 = arith.negf %203 : vector<1x64xf32>
    %205 = math.exp %204 : vector<1x64xf32>
    %cst_58 = arith.constant 1.000000e+00 : f32
    %206 = vector.broadcast %cst_58 : f32 to vector<1x64xf32>
    %207 = arith.addf %206, %205 : vector<1x64xf32>
    %208 = arith.divf %206, %207 : vector<1x64xf32>
    %209 = vector.extract_strided_slice %208 {offsets = [0, 0], sizes = [1, 32], strides = [1, 1]} : vector<1x64xf32> to vector<1x32xf32>
    %210 = vector.extract_strided_slice %208 {offsets = [0, 32], sizes = [1, 32], strides = [1, 1]} : vector<1x64xf32> to vector<1x32xf32>
    %211 = vector.extract_strided_slice %198 {offsets = [0, 64], sizes = [1, 32], strides = [1, 1]} : vector<1x96xf32> to vector<1x32xf32>
    %212 = vector.extract_strided_slice %200 {offsets = [0, 64], sizes = [1, 32], strides = [1, 1]} : vector<1x96xf32> to vector<1x32xf32>
    %213 = arith.mulf %209, %212 : vector<1x32xf32>
    %214 = arith.addf %211, %213 : vector<1x32xf32>
    %215 = math.tanh %214 : vector<1x32xf32>
    %216 = arith.subf %197, %215 : vector<1x32xf32>
    %217 = arith.mulf %210, %216 : vector<1x32xf32>
    %218 = arith.addf %215, %217 : vector<1x32xf32>
    %c0_59 = arith.constant 0 : index
    %c0_60 = arith.constant 0 : index
    %c0_61 = arith.constant 0 : index
    %219 = vector.load %arg20[%c0_59, %c0_60, %c0_61] : memref<1x1x32xf32, #tpu.memory_space<vmem>>, vector<1x1x32xf32>
    %220 = vector.shape_cast %219 : vector<1x1x32xf32> to vector<1x32xf32>
    %221 = vector.shape_cast %218 : vector<1x32xf32> to vector<1x1x32xf32>
    tpu.vector_store %arg20[%c0_59, %c0_60, %c0_61], %221 {strides = array<i32>} : memref<1x1x32xf32, #tpu.memory_space<vmem>>, vector<1x1x32xf32>,
    %222 = tpu.concatenate %71, %92, %113, %134, %155, %176, %197, %218 in 0 : vector<1x32xf32>, vector<1x32xf32>, vector<1x32xf32>, vector<1x32xf32>, vector<1x32xf32>, vector<1x32xf32>, vector<1x32xf32>, vector<1x32xf32> -> vector<8x32xf32>
    %c0_62 = arith.constant 0 : index
    %c0_63 = arith.constant 0 : index
    %223 = vector.load %arg16[%c0_62, %c0_63] : memref<32x128xf32, #tpu.memory_space<vmem>>, vector<32x128xf32>
    %cst_64 = arith.constant dense<0.000000e+00> : vector<8x128xf32>
    %224 = tpu.matmul %222, %223, %cst_64 {dimension_numbers = #tpu.dot_dimension_numbers<[1], [0], [0], [1], [0, 0, 1, 1], [], []>} : vector<8x32xf32>, vector<32x128xf32>, vector<8x128xf32> -> vector<8x128xf32>
    %c0_65 = arith.constant 0 : index
    %c0_66 = arith.constant 0 : index
    %225 = vector.load %arg17[%c0_65, %c0_66] : memref<1x128xf32, #tpu.memory_space<vmem>>, vector<1x128xf32>
    %226 = vector.broadcast %225 : vector<1x128xf32> to vector<8x128xf32>
    %227 = arith.addf %224, %226 : vector<8x128xf32>
    %c0_67 = arith.constant 0 : index
    %c0_68 = arith.constant 0 : index
    %c0_69 = arith.constant 0 : index
    %228 = vector.load %arg19[%c0_67, %c0_68, %c0_69] : memref<1x8x128xf32, #tpu.memory_space<vmem>>, vector<1x8x128xf32>
    %229 = vector.shape_cast %228 : vector<1x8x128xf32> to vector<8x128xf32>
    %230 = vector.shape_cast %227 : vector<8x128xf32> to vector<1x8x128xf32>
    tpu.vector_store %arg19[%c0_67, %c0_68, %c0_69], %230 {strides = array<i32>} : memref<1x8x128xf32, #tpu.memory_space<vmem>>, vector<1x8x128xf32>,
    return
  }
  func.func @transform_0(%arg0: i32) -> (i32, i32, i32) {
    %c0_i32 = arith.constant 0 : i32
    %c0_i32_0 = arith.constant 0 : i32
    %c0_i32_1 = arith.constant 0 : i32
    return %arg0, %c0_i32, %c0_i32_0 : i32, i32, i32
  }
  func.func @transform_1(%arg0: i32) -> (i32, i32) {
    %c0_i32 = arith.constant 0 : i32
    %c0_i32_0 = arith.constant 0 : i32
    %c0_i32_1 = arith.constant 0 : i32
    return %c0_i32, %c0_i32_0 : i32, i32
  }
  func.func @transform_2(%arg0: i32) -> (i32, i32) {
    %c0_i32 = arith.constant 0 : i32
    %c0_i32_0 = arith.constant 0 : i32
    %c0_i32_1 = arith.constant 0 : i32
    return %c0_i32, %c0_i32_0 : i32, i32
  }
  func.func @transform_3(%arg0: i32) -> (i32, i32) {
    %c0_i32 = arith.constant 0 : i32
    %c0_i32_0 = arith.constant 0 : i32
    %c0_i32_1 = arith.constant 0 : i32
    return %c0_i32, %c0_i32_0 : i32, i32
  }
  func.func @transform_4(%arg0: i32) -> (i32, i32) {
    %c0_i32 = arith.constant 0 : i32
    %c0_i32_0 = arith.constant 0 : i32
    %c0_i32_1 = arith.constant 0 : i32
    return %c0_i32, %c0_i32_0 : i32, i32
  }
  func.func @transform_5(%arg0: i32) -> (i32, i32) {
    %c0_i32 = arith.constant 0 : i32
    %c0_i32_0 = arith.constant 0 : i32
    %c0_i32_1 = arith.constant 0 : i32
    return %c0_i32, %c0_i32_0 : i32, i32
  }
  func.func @transform_6(%arg0: i32) -> (i32, i32) {
    %c0_i32 = arith.constant 0 : i32
    %c0_i32_0 = arith.constant 0 : i32
    %c0_i32_1 = arith.constant 0 : i32
    return %c0_i32, %c0_i32_0 : i32, i32
  }
  func.func @transform_7(%arg0: i32) -> (i32, i32) {
    %c0_i32 = arith.constant 0 : i32
    %c0_i32_0 = arith.constant 0 : i32
    %c0_i32_1 = arith.constant 0 : i32
    return %c0_i32, %c0_i32_0 : i32, i32
  }
  func.func @transform_8(%arg0: i32) -> (i32, i32) {
    %c0_i32 = arith.constant 0 : i32
    %c0_i32_0 = arith.constant 0 : i32
    %c0_i32_1 = arith.constant 0 : i32
    return %c0_i32, %c0_i32_0 : i32, i32
  }
  func.func @transform_9(%arg0: i32) -> (i32, i32) {
    %c0_i32 = arith.constant 0 : i32
    %c0_i32_0 = arith.constant 0 : i32
    %c0_i32_1 = arith.constant 0 : i32
    return %c0_i32, %c0_i32_0 : i32, i32
  }
  func.func @transform_10(%arg0: i32) -> (i32, i32) {
    %c0_i32 = arith.constant 0 : i32
    %c0_i32_0 = arith.constant 0 : i32
    %c0_i32_1 = arith.constant 0 : i32
    return %c0_i32, %c0_i32_0 : i32, i32
  }
  func.func @transform_11(%arg0: i32) -> (i32, i32) {
    %c0_i32 = arith.constant 0 : i32
    %c0_i32_0 = arith.constant 0 : i32
    %c0_i32_1 = arith.constant 0 : i32
    return %c0_i32, %c0_i32_0 : i32, i32
  }
  func.func @transform_12(%arg0: i32) -> (i32, i32) {
    %c0_i32 = arith.constant 0 : i32
    %c0_i32_0 = arith.constant 0 : i32
    %c0_i32_1 = arith.constant 0 : i32
    return %c0_i32, %c0_i32_0 : i32, i32
  }
  func.func @transform_13(%arg0: i32) -> (i32, i32) {
    %c0_i32 = arith.constant 0 : i32
    %c0_i32_0 = arith.constant 0 : i32
    %c0_i32_1 = arith.constant 0 : i32
    return %c0_i32, %c0_i32_0 : i32, i32
  }
  func.func @transform_14(%arg0: i32) -> (i32, i32) {
    %c0_i32 = arith.constant 0 : i32
    %c0_i32_0 = arith.constant 0 : i32
    %c0_i32_1 = arith.constant 0 : i32
    return %c0_i32, %c0_i32_0 : i32, i32
  }
  func.func @transform_15(%arg0: i32) -> (i32, i32) {
    %c0_i32 = arith.constant 0 : i32
    %c0_i32_0 = arith.constant 0 : i32
    %c0_i32_1 = arith.constant 0 : i32
    return %c0_i32, %c0_i32_0 : i32, i32
  }
  func.func @transform_16(%arg0: i32) -> (i32, i32) {
    %c0_i32 = arith.constant 0 : i32
    %c0_i32_0 = arith.constant 0 : i32
    %c0_i32_1 = arith.constant 0 : i32
    return %c0_i32, %c0_i32_0 : i32, i32
  }
  func.func @transform_17(%arg0: i32) -> (i32, i32, i32) {
    %c0_i32 = arith.constant 0 : i32
    %c0_i32_0 = arith.constant 0 : i32
    %c0_i32_1 = arith.constant 0 : i32
    return %arg0, %c0_i32, %c0_i32_0 : i32, i32, i32
  }
  func.func @transform_18(%arg0: i32) -> (i32, i32, i32) {
    %c0_i32 = arith.constant 0 : i32
    %c0_i32_0 = arith.constant 0 : i32
    %c0_i32_1 = arith.constant 0 : i32
    return %arg0, %c0_i32, %c0_i32_0 : i32, i32, i32
  }
  func.func @transform_19(%arg0: i32) -> (i32, i32, i32) {
    %c0_i32 = arith.constant 0 : i32
    %c0_i32_0 = arith.constant 0 : i32
    %c0_i32_1 = arith.constant 0 : i32
    return %arg0, %c0_i32, %c0_i32_0 : i32, i32, i32
  }
}

</mosaic_0001>

<llo_original>
// kernel: dqn_gru_cnn_pallas_batched.1
$region0: #{dqn_gru_cnn_pallas_batched.1}
  #allocation0 [shape = 'u32[]', space=smem, size = 0x4, offset = 0x4, fixed_abs, tag = 'smem constant byte address 0x4 - core index']
  #allocation1 [shape = 'u32[72,128]{1,0:T(1,128)}', space=vmem, size = 0x9000, scoped, tag = 'internal scratch']
  %s0 = inlined_call_operand.vmem [shape: f32[4,8,16], index: 0, kind: input, shape index: {}]
  %s1 = inlined_call_operand.vmem [shape: bf16[16,256], index: 1, kind: input, shape index: {}]
  %s2 = inlined_call_operand.vmem [shape: f32[1,256], index: 2, kind: input, shape index: {}]
  %s3 = inlined_call_operand.hbm [shape: bf16[256,512], index: 3, kind: input, shape index: {}]
  %s4 = inlined_call_operand.vmem [shape: f32[1,256], index: 4, kind: input, shape index: {}]
  %s5 = inlined_call_operand.vmem [shape: f32[256,32], index: 5, kind: input, shape index: {}]
  %s6 = inlined_call_operand.vmem [shape: f32[1,32], index: 6, kind: input, shape index: {}]
  %s7 = inlined_call_operand.vmem [shape: f32[32,32], index: 7, kind: input, shape index: {}]
  %s8 = inlined_call_operand.vmem [shape: f32[1,32], index: 8, kind: input, shape index: {}]
  %s9 = inlined_call_operand.vmem [shape: f32[32,32], index: 9, kind: input, shape index: {}]
  %s10 = inlined_call_operand.vmem [shape: f32[1,32], index: 10, kind: input, shape index: {}]
  %s11 = inlined_call_operand.vmem [shape: f32[32,96], index: 11, kind: input, shape index: {}]
  %s12 = inlined_call_operand.vmem [shape: f32[32,96], index: 12, kind: input, shape index: {}]
  %s13 = inlined_call_operand.vmem [shape: f32[1,96], index: 13, kind: input, shape index: {}]
  %s14 = inlined_call_operand.vmem [shape: f32[1,96], index: 14, kind: input, shape index: {}]
  %s15 = inlined_call_operand.vmem [shape: f32[32,128], index: 15, kind: input, shape index: {}]
  %s16 = inlined_call_operand.vmem [shape: f32[1,128], index: 16, kind: input, shape index: {}]
  %s17 = inlined_call_operand.vmem [shape: f32[4,1,32], index: 17, kind: input, shape index: {}]
  %s18 = inlined_call_operand.vmem [shape: f32[4,8,128], index: 18, kind: output, shape index: {0}]
  %s19 = inlined_call_operand.hbm [shape: f32[4,1,32], index: 19, kind: output, shape index: {1}]
  %20 = xla_tuple %s18, %s19
  %s21 = sld [smem:[#allocation0]]
  $region117: #{dqn_gru_cnn_pallas_batched.1} parent=0
    _
  %s23 = ssub.s32 1, %s21
  %s24 = scalar_select 0, %s23, %s21
  $region1: #{dqn_gru_cnn_pallas_batched.1} parent=0
    #allocation2 [shape = 'u8[262144]{0}', space=vmem, size = 0x40000, scoped, tag = 'input window, operand 3, single buffered']
    #allocation3 [shape = 's32[2]{0}', space=sflag, size = 0x8, scoped, tag = 'scoped memory for dqn_gru_cnn_pallas_batched.1']
    #allocation4 [shape = 's32[2]{0}', space=sflag, size = 0x8, scoped, tag = 'scoped memory for dqn_gru_cnn_pallas_batched.1']
    #allocation5 [shape = 'u8[1024]{0}', space=vmem, size = 0x400, scoped, tag = 'output window, operand 1']
    %25 = vsyncpa [#allocation3], 0
    %26 = vsyncpa [#allocation4], 0
    %s27 = scalar_lea.sflag [#allocation4], 1
    %28 = vsyncpa %s27, 0
    loop: start=0, step=1, limit=6
    $region2: #{dqn_gru_cnn_pallas_batched.1} parent=1 // loop_pre_header
      _
    $region3: #{dqn_gru_cnn_pallas_batched.1} parent=1 // loop_header
      %s30 = sphi 0, %s34
      %p31 = scmp.ge.s32.totalorder %s30, 6
      %s40 = sphi 0, %s42
      %s43 = sphi 0, %s40
      %s44 = sphi 0, %s43
      %s60 = sphi 0, %s44
      %s64 = sphi 0, %s64
      %s66 = sphi 0, %s64
      %s67 = sphi 0, %s66
      %s81 = sphi 0, %s67
      %s85 = sphi 0, %s85
      %s87 = sphi 0, %s85
      %s88 = sphi 0, %s87
      %s102 = sphi 0, %s88
      %s106 = sphi 0, %s106
      %s108 = sphi 0, %s106
      %s109 = sphi 0, %s108
      %s123 = sphi 0, %s109
      %s127 = sphi 0, %s127
      %s129 = sphi 0, %s127
      %s130 = sphi 0, %s129
      %s144 = sphi 0, %s130
      %s148 = sphi 0, %s148
      %s150 = sphi 0, %s148
      %s151 = sphi 0, %s150
      %s165 = sphi 0, %s151
      %s169 = sphi 0, %s169
      %s171 = sphi 0, %s169
      %s172 = sphi 0, %s171
      %s186 = sphi 0, %s172
      %s190 = sphi 0, %s190
      %s192 = sphi 0, %s190
      %s193 = sphi 0, %s192
      %s207 = sphi 0, %s193
      %s211 = sphi 0, %s211
      %s213 = sphi 0, %s211
      %s214 = sphi 0, %s213
      %s228 = sphi 0, %s214
      %s232 = sphi 0, %s232
      %s234 = sphi 0, %s232
      %s235 = sphi 0, %s234
      %s249 = sphi 0, %s235
      %s253 = sphi 0, %s253
      %s255 = sphi 0, %s253
      %s256 = sphi 0, %s255
      %s270 = sphi 0, %s256
      %s274 = sphi 0, %s274
      %s276 = sphi 0, %s274
      %s277 = sphi 0, %s276
      %s291 = sphi 0, %s277
      %s295 = sphi 0, %s295
      %s297 = sphi 0, %s295
      %s298 = sphi 0, %s297
      %s312 = sphi 0, %s298
      %s316 = sphi 0, %s316
      %s318 = sphi 0, %s316
      %s319 = sphi 0, %s318
      %s333 = sphi 0, %s319
      %s337 = sphi 0, %s337
      %s339 = sphi 0, %s337
      %s340 = sphi 0, %s339
      %s354 = sphi 0, %s340
      %s358 = sphi 0, %s358
      %s360 = sphi 0, %s358
      %s361 = sphi 0, %s360
      %s375 = sphi 0, %s361
      %s379 = sphi 0, %s379
      %s381 = sphi 0, %s379
      %s382 = sphi 0, %s381
      %s396 = sphi 0, %s382
      %s402 = sphi 0, %s404
      %s405 = sphi 0, %s402
      %s406 = sphi 0, %s405
      %s422 = sphi 0, %s406
      %s428 = sphi 0, %s430
      %s431 = sphi 0, %s428
      %s432 = sphi 0, %s431
      %s448 = sphi 0, %s432
      %s454 = sphi 0, %s456
      %s457 = sphi 0, %s454
      %s458 = sphi 0, %s457
      %s474 = sphi 0, %s458
    $region4: #{dqn_gru_cnn_pallas_batched.1} parent=1 // loop_header_branch
      %33 = sbr.rel (%p31) target = $region8
    $region5: #{dqn_gru_cnn_pallas_batched.1} parent=1 // loop_body
      %s35 = ssub.s32 %s30, 1
      %s36 = ssub.s32 %s30, 2
      %s37 = sadd.s32 %s30, 1
      %s38 = ssub.s32 %s30, %s37
      %p39 = scmp.eq.s32.totalorder %s38, 0
      %s41 = sadd.s32 %s40, 1
      %s42 = scalar_select %p39, %s40, %s41
      %p45 = pneg %p39
      %p46 = scmp.eq.s32.totalorder %s30, 3
      %p47 = por %p45, %p46
      %p48 = scmp.ne.s32.totalorder %s40, %s43
      %p49 = scmp.eq.s32.totalorder %s30, 0
      %p50 = por %p48, %p49
      %p51 = scmp.ne.s32.totalorder %s40, %s43
      %p52 = scmp.eq.s32.totalorder %s35, 3
      %p53 = por %p51, %p52
      %p54 = scmp.ne.s32.totalorder %s43, %s44
      %p55 = scmp.eq.s32.totalorder %s35, 0
      %p56 = por %p54, %p55
      %p57 = scmp.ne.s32.totalorder %s43, %s44
      %p58 = scmp.eq.s32.totalorder %s36, 3
      %p59 = por %p57, %p58
      %p61 = scmp.ne.s32.totalorder %s44, %s60
      %p62 = scmp.eq.s32.totalorder %s36, 0
      %p63 = por %p61, %p62
      %s65 = sadd.s32 %s64, 1
      %p68 = scmp.eq.s32.totalorder %s30, 3
      %p69 = scmp.ne.s32.totalorder %s64, %s66
      %p70 = scmp.eq.s32.totalorder %s30, 0
      %p71 = por %p69, %p70
      %p72 = scmp.ne.s32.totalorder %s64, %s66
      %p73 = scmp.eq.s32.totalorder %s35, 3
      %p74 = por %p72, %p73
      %p75 = scmp.ne.s32.totalorder %s66, %s67
      %p76 = scmp.eq.s32.totalorder %s35, 0
      %p77 = por %p75, %p76
      %p78 = scmp.ne.s32.totalorder %s66, %s67
      %p79 = scmp.eq.s32.totalorder %s36, 3
      %p80 = por %p78, %p79
      %p82 = scmp.ne.s32.totalorder %s67, %s81
      %p83 = scmp.eq.s32.totalorder %s36, 0
      %p84 = por %p82, %p83
      %s86 = sadd.s32 %s85, 1
      %p89 = scmp.eq.s32.totalorder %s30, 3
      %p90 = scmp.ne.s32.totalorder %s85, %s87
      %p91 = scmp.eq.s32.totalorder %s30, 0
      %p92 = por %p90, %p91
      %p93 = scmp.ne.s32.totalorder %s85, %s87
      %p94 = scmp.eq.s32.totalorder %s35, 3
      %p95 = por %p93, %p94
      %p96 = scmp.ne.s32.totalorder %s87, %s88
      %p97 = scmp.eq.s32.totalorder %s35, 0
      %p98 = por %p96, %p97
      %p99 = scmp.ne.s32.totalorder %s87, %s88
      %p100 = scmp.eq.s32.totalorder %s36, 3
      %p101 = por %p99, %p100
      %p103 = scmp.ne.s32.totalorder %s88, %s102
      %p104 = scmp.eq.s32.totalorder %s36, 0
      %p105 = por %p103, %p104
      %s107 = sadd.s32 %s106, 1
      %p110 = scmp.eq.s32.totalorder %s30, 3
      %p111 = scmp.ne.s32.totalorder %s106, %s108
      %p112 = scmp.eq.s32.totalorder %s30, 0
      %p113 = por %p111, %p112
      %p114 = scmp.ne.s32.totalorder %s106, %s108
      %p115 = scmp.eq.s32.totalorder %s35, 3
      %p116 = por %p114, %p115
      %p117 = scmp.ne.s32.totalorder %s108, %s109
      %p118 = scmp.eq.s32.totalorder %s35, 0
      %p119 = por %p117, %p118
      %p120 = scmp.ne.s32.totalorder %s108, %s109
      %p121 = scmp.eq.s32.totalorder %s36, 3
      %p122 = por %p120, %p121
      %p124 = scmp.ne.s32.totalorder %s109, %s123
      %p125 = scmp.eq.s32.totalorder %s36, 0
      %p126 = por %p124, %p125
      %s128 = sadd.s32 %s127, 1
      %p131 = scmp.eq.s32.totalorder %s30, 3
      %p132 = scmp.ne.s32.totalorder %s127, %s129
      %p133 = scmp.eq.s32.totalorder %s30, 0
      %p134 = por %p132, %p133
      %p135 = scmp.ne.s32.totalorder %s127, %s129
      %p136 = scmp.eq.s32.totalorder %s35, 3
      %p137 = por %p135, %p136
      %p138 = scmp.ne.s32.totalorder %s129, %s130
      %p139 = scmp.eq.s32.totalorder %s35, 0
      %p140 = por %p138, %p139
      %p141 = scmp.ne.s32.totalorder %s129, %s130
      %p142 = scmp.eq.s32.totalorder %s36, 3
      %p143 = por %p141, %p142
      %p145 = scmp.ne.s32.totalorder %s130, %s144
      %p146 = scmp.eq.s32.totalorder %s36, 0
      %p147 = por %p145, %p146
      %s149 = sadd.s32 %s148, 1
      %p152 = scmp.eq.s32.totalorder %s30, 3
      %p153 = scmp.ne.s32.totalorder %s148, %s150
      %p154 = scmp.eq.s32.totalorder %s30, 0
      %p155 = por %p153, %p154
      %p156 = scmp.ne.s32.totalorder %s148, %s150
      %p157 = scmp.eq.s32.totalorder %s35, 3
      %p158 = por %p156, %p157
      %p159 = scmp.ne.s32.totalorder %s150, %s151
      %p160 = scmp.eq.s32.totalorder %s35, 0
      %p161 = por %p159, %p160
      %p162 = scmp.ne.s32.totalorder %s150, %s151
      %p163 = scmp.eq.s32.totalorder %s36, 3
      %p164 = por %p162, %p163
      %p166 = scmp.ne.s32.totalorder %s151, %s165
      %p167 = scmp.eq.s32.totalorder %s36, 0
      %p168 = por %p166, %p167
      %s170 = sadd.s32 %s169, 1
      %p173 = scmp.eq.s32.totalorder %s30, 3
      %p174 = scmp.ne.s32.totalorder %s169, %s171
      %p175 = scmp.eq.s32.totalorder %s30, 0
      %p176 = por %p174, %p175
      %p177 = scmp.ne.s32.totalorder %s169, %s171
      %p178 = scmp.eq.s32.totalorder %s35, 3
      %p179 = por %p177, %p178
      %p180 = scmp.ne.s32.totalorder %s171, %s172
      %p181 = scmp.eq.s32.totalorder %s35, 0
      %p182 = por %p180, %p181
      %p183 = scmp.ne.s32.totalorder %s171, %s172
      %p184 = scmp.eq.s32.totalorder %s36, 3
      %p185 = por %p183, %p184
      %p187 = scmp.ne.s32.totalorder %s172, %s186
      %p188 = scmp.eq.s32.totalorder %s36, 0
      %p189 = por %p187, %p188
      %s191 = sadd.s32 %s190, 1
      %p194 = scmp.eq.s32.totalorder %s30, 3
      %p195 = scmp.ne.s32.totalorder %s190, %s192
      %p196 = scmp.eq.s32.totalorder %s30, 0
      %p197 = por %p195, %p196
      %p198 = scmp.ne.s32.totalorder %s190, %s192
      %p199 = scmp.eq.s32.totalorder %s35, 3
      %p200 = por %p198, %p199
      %p201 = scmp.ne.s32.totalorder %s192, %s193
      %p202 = scmp.eq.s32.totalorder %s35, 0
      %p203 = por %p201, %p202
      %p204 = scmp.ne.s32.totalorder %s192, %s193
      %p205 = scmp.eq.s32.totalorder %s36, 3
      %p206 = por %p204, %p205
      %p208 = scmp.ne.s32.totalorder %s193, %s207
      %p209 = scmp.eq.s32.totalorder %s36, 0
      %p210 = por %p208, %p209
      %s212 = sadd.s32 %s211, 1
      %p215 = scmp.eq.s32.totalorder %s30, 3
      %p216 = scmp.ne.s32.totalorder %s211, %s213
      %p217 = scmp.eq.s32.totalorder %s30, 0
      %p218 = por %p216, %p217
      %p219 = scmp.ne.s32.totalorder %s211, %s213
      %p220 = scmp.eq.s32.totalorder %s35, 3
      %p221 = por %p219, %p220
      %p222 = scmp.ne.s32.totalorder %s213, %s214
      %p223 = scmp.eq.s32.totalorder %s35, 0
      %p224 = por %p222, %p223
      %p225 = scmp.ne.s32.totalorder %s213, %s214
      %p226 = scmp.eq.s32.totalorder %s36, 3
      %p227 = por %p225, %p226
      %p229 = scmp.ne.s32.totalorder %s214, %s228
      %p230 = scmp.eq.s32.totalorder %s36, 0
      %p231 = por %p229, %p230
      %s233 = sadd.s32 %s232, 1
      %p236 = scmp.eq.s32.totalorder %s30, 3
      %p237 = scmp.ne.s32.totalorder %s232, %s234
      %p238 = scmp.eq.s32.totalorder %s30, 0
      %p239 = por %p237, %p238
      %p240 = scmp.ne.s32.totalorder %s232, %s234
      %p241 = scmp.eq.s32.totalorder %s35, 3
      %p242 = por %p240, %p241
      %p243 = scmp.ne.s32.totalorder %s234, %s235
      %p244 = scmp.eq.s32.totalorder %s35, 0
      %p245 = por %p243, %p244
      %p246 = scmp.ne.s32.totalorder %s234, %s235
      %p247 = scmp.eq.s32.totalorder %s36, 3
      %p248 = por %p246, %p247
      %p250 = scmp.ne.s32.totalorder %s235, %s249
      %p251 = scmp.eq.s32.totalorder %s36, 0
      %p252 = por %p250, %p251
      %s254 = sadd.s32 %s253, 1
      %p257 = scmp.eq.s32.totalorder %s30, 3
      %p258 = scmp.ne.s32.totalorder %s253, %s255
      %p259 = scmp.eq.s32.totalorder %s30, 0
      %p260 = por %p258, %p259
      %p261 = scmp.ne.s32.totalorder %s253, %s255
      %p262 = scmp.eq.s32.totalorder %s35, 3
      %p263 = por %p261, %p262
      %p264 = scmp.ne.s32.totalorder %s255, %s256
      %p265 = scmp.eq.s32.totalorder %s35, 0
      %p266 = por %p264, %p265
      %p267 = scmp.ne.s32.totalorder %s255, %s256
      %p268 = scmp.eq.s32.totalorder %s36, 3
      %p269 = por %p267, %p268
      %p271 = scmp.ne.s32.totalorder %s256, %s270
      %p272 = scmp.eq.s32.totalorder %s36, 0
      %p273 = por %p271, %p272
      %s275 = sadd.s32 %s274, 1
      %p278 = scmp.eq.s32.totalorder %s30, 3
      %p279 = scmp.ne.s32.totalorder %s274, %s276
      %p280 = scmp.eq.s32.totalorder %s30, 0
      %p281 = por %p279, %p280
      %p282 = scmp.ne.s32.totalorder %s274, %s276
      %p283 = scmp.eq.s32.totalorder %s35, 3
      %p284 = por %p282, %p283
      %p285 = scmp.ne.s32.totalorder %s276, %s277
      %p286 = scmp.eq.s32.totalorder %s35, 0
      %p287 = por %p285, %p286
      %p288 = scmp.ne.s32.totalorder %s276, %s277
      %p289 = scmp.eq.s32.totalorder %s36, 3
      %p290 = por %p288, %p289
      %p292 = scmp.ne.s32.totalorder %s277, %s291
      %p293 = scmp.eq.s32.totalorder %s36, 0
      %p294 = por %p292, %p293
      %s296 = sadd.s32 %s295, 1
      %p299 = scmp.eq.s32.totalorder %s30, 3
      %p300 = scmp.ne.s32.totalorder %s295, %s297
      %p301 = scmp.eq.s32.totalorder %s30, 0
      %p302 = por %p300, %p301
      %p303 = scmp.ne.s32.totalorder %s295, %s297
      %p304 = scmp.eq.s32.totalorder %s35, 3
      %p305 = por %p303, %p304
      %p306 = scmp.ne.s32.totalorder %s297, %s298
      %p307 = scmp.eq.s32.totalorder %s35, 0
      %p308 = por %p306, %p307
      %p309 = scmp.ne.s32.totalorder %s297, %s298
      %p310 = scmp.eq.s32.totalorder %s36, 3
      %p311 = por %p309, %p310
      %p313 = scmp.ne.s32.totalorder %s298, %s312
      %p314 = scmp.eq.s32.totalorder %s36, 0
      %p315 = por %p313, %p314
      %s317 = sadd.s32 %s316, 1
      %p320 = scmp.eq.s32.totalorder %s30, 3
      %p321 = scmp.ne.s32.totalorder %s316, %s318
      %p322 = scmp.eq.s32.totalorder %s30, 0
      %p323 = por %p321, %p322
      %p324 = scmp.ne.s32.totalorder %s316, %s318
      %p325 = scmp.eq.s32.totalorder %s35, 3
      %p326 = por %p324, %p325
      %p327 = scmp.ne.s32.totalorder %s318, %s319
      %p328 = scmp.eq.s32.totalorder %s35, 0
      %p329 = por %p327, %p328
      %p330 = scmp.ne.s32.totalorder %s318, %s319
      %p331 = scmp.eq.s32.totalorder %s36, 3
      %p332 = por %p330, %p331
      %p334 = scmp.ne.s32.totalorder %s319, %s333
      %p335 = scmp.eq.s32.totalorder %s36, 0
      %p336 = por %p334, %p335
      %s338 = sadd.s32 %s337, 1
      %p341 = scmp.eq.s32.totalorder %s30, 3
      %p342 = scmp.ne.s32.totalorder %s337, %s339
      %p343 = scmp.eq.s32.totalorder %s30, 0
      %p344 = por %p342, %p343
      %p345 = scmp.ne.s32.totalorder %s337, %s339
      %p346 = scmp.eq.s32.totalorder %s35, 3
      %p347 = por %p345, %p346
      %p348 = scmp.ne.s32.totalorder %s339, %s340
      %p349 = scmp.eq.s32.totalorder %s35, 0
      %p350 = por %p348, %p349
      %p351 = scmp.ne.s32.totalorder %s339, %s340
      %p352 = scmp.eq.s32.totalorder %s36, 3
      %p353 = por %p351, %p352
      %p355 = scmp.ne.s32.totalorder %s340, %s354
      %p356 = scmp.eq.s32.totalorder %s36, 0
      %p357 = por %p355, %p356
      %s359 = sadd.s32 %s358, 1
      %p362 = scmp.eq.s32.totalorder %s30, 3
      %p363 = scmp.ne.s32.totalorder %s358, %s360
      %p364 = scmp.eq.s32.totalorder %s30, 0
      %p365 = por %p363, %p364
      %p366 = scmp.ne.s32.totalorder %s358, %s360
      %p367 = scmp.eq.s32.totalorder %s35, 3
      %p368 = por %p366, %p367
      %p369 = scmp.ne.s32.totalorder %s360, %s361
      %p370 = scmp.eq.s32.totalorder %s35, 0
      %p371 = por %p369, %p370
      %p372 = scmp.ne.s32.totalorder %s360, %s361
      %p373 = scmp.eq.s32.totalorder %s36, 3
      %p374 = por %p372, %p373
      %p376 = scmp.ne.s32.totalorder %s361, %s375
      %p377 = scmp.eq.s32.totalorder %s36, 0
      %p378 = por %p376, %p377
      %s380 = sadd.s32 %s379, 1
      %p383 = scmp.eq.s32.totalorder %s30, 3
      %p384 = scmp.ne.s32.totalorder %s379, %s381
      %p385 = scmp.eq.s32.totalorder %s30, 0
      %p386 = por %p384, %p385
      %p387 = scmp.ne.s32.totalorder %s379, %s381
      %p388 = scmp.eq.s32.totalorder %s35, 3
      %p389 = por %p387, %p388
      %p390 = scmp.ne.s32.totalorder %s381, %s382
      %p391 = scmp.eq.s32.totalorder %s35, 0
      %p392 = por %p390, %p391
      %p393 = scmp.ne.s32.totalorder %s381, %s382
      %p394 = scmp.eq.s32.totalorder %s36, 3
      %p395 = por %p393, %p394
      %p397 = scmp.ne.s32.totalorder %s382, %s396
      %p398 = scmp.eq.s32.totalorder %s36, 0
      %p399 = por %p397, %p398
      %s400 = ssub.s32 %s30, %s37
      %p401 = scmp.eq.s32.totalorder %s400, 0
      %s403 = sadd.s32 %s402, 1
      %s404 = scalar_select %p401, %s402, %s403
      %p407 = pneg %p401
      %p408 = scmp.eq.s32.totalorder %s30, 3
      %p409 = por %p407, %p408
      %p410 = scmp.ne.s32.totalorder %s402, %s405
      %p411 = scmp.eq.s32.totalorder %s30, 0
      %p412 = por %p410, %p411
      %p413 = scmp.ne.s32.totalorder %s402, %s405
      %p414 = scmp.eq.s32.totalorder %s35, 3
      %p415 = por %p413, %p414
      %p416 = scmp.ne.s32.totalorder %s405, %s406
      %p417 = scmp.eq.s32.totalorder %s35, 0
      %p418 = por %p416, %p417
      %p419 = scmp.ne.s32.totalorder %s405, %s406
      %p420 = scmp.eq.s32.totalorder %s36, 3
      %p421 = por %p419, %p420
      %p423 = scmp.ne.s32.totalorder %s406, %s422
      %p424 = scmp.eq.s32.totalorder %s36, 0
      %p425 = por %p423, %p424
      %s426 = ssub.s32 %s30, %s37
      %p427 = scmp.eq.s32.totalorder %s426, 0
      %s429 = sadd.s32 %s428, 1
      %s430 = scalar_select %p427, %s428, %s429
      %p433 = pneg %p427
      %p434 = scmp.eq.s32.totalorder %s30, 3
      %p435 = por %p433, %p434
      %p436 = scmp.ne.s32.totalorder %s428, %s431
      %p437 = scmp.eq.s32.totalorder %s30, 0
      %p438 = por %p436, %p437
      %p439 = scmp.ne.s32.totalorder %s428, %s431
      %p440 = scmp.eq.s32.totalorder %s35, 3
      %p441 = por %p439, %p440
      %p442 = scmp.ne.s32.totalorder %s431, %s432
      %p443 = scmp.eq.s32.totalorder %s35, 0
      %p444 = por %p442, %p443
      %p445 = scmp.ne.s32.totalorder %s431, %s432
      %p446 = scmp.eq.s32.totalorder %s36, 3
      %p447 = por %p445, %p446
      %p449 = scmp.ne.s32.totalorder %s432, %s448
      %p450 = scmp.eq.s32.totalorder %s36, 0
      %p451 = por %p449, %p450
      %s452 = ssub.s32 %s30, %s37
      %p453 = scmp.eq.s32.totalorder %s452, 0
      %s455 = sadd.s32 %s454, 1
      %s456 = scalar_select %p453, %s454, %s455
      %p459 = pneg %p453
      %p460 = scmp.eq.s32.totalorder %s30, 3
      %p461 = por %p459, %p460
      %p462 = scmp.ne.s32.totalorder %s454, %s457
      %p463 = scmp.eq.s32.totalorder %s30, 0
      %p464 = por %p462, %p463
      %p465 = scmp.ne.s32.totalorder %s454, %s457
      %p466 = scmp.eq.s32.totalorder %s35, 3
      %p467 = por %p465, %p466
      %p468 = scmp.ne.s32.totalorder %s457, %s458
      %p469 = scmp.eq.s32.totalorder %s35, 0
      %p470 = por %p468, %p469
      %p471 = scmp.ne.s32.totalorder %s457, %s458
      %p472 = scmp.eq.s32.totalorder %s36, 3
      %p473 = por %p471, %p472
      %p475 = scmp.ne.s32.totalorder %s458, %s474
      %p476 = scmp.eq.s32.totalorder %s36, 0
      %p477 = por %p475, %p476
      %p478 = scmp.le.s32.totalorder 1, %s30
      %p479 = scmp.lt.s32.totalorder %s30, 5
      %p480 = pnand %p478, %p479
      %p481 = pneg %p480
      // Predicated region
      $region9: #{dqn_gru_cnn_pallas_batched.1} parent=5 // pred_check
        _
      $region10: #{dqn_gru_cnn_pallas_batched.1} parent=5 // pred_check_branch
        %483 = sbr.rel (%p480) target = $region12
      $region11: #{dqn_gru_cnn_pallas_batched.1} parent=5 // pred_region
        %s484 = ssub.s32 %s30, 1
        // Predicated region
        $region13: #{dqn_gru_cnn_pallas_batched.1} parent=11 // pred_check
          %p485 = pneg %p77
        $region14: #{dqn_gru_cnn_pallas_batched.1} parent=11 // pred_check_branch
          %487 = sbr.rel (%p485) target = $region16
        $region15: #{dqn_gru_cnn_pallas_batched.1} parent=11 // pred_region
          _
        $region16: #{dqn_gru_cnn_pallas_batched.1} parent=11 // pred_fallthru
          _
        // Predicated region
        $region17: #{dqn_gru_cnn_pallas_batched.1} parent=11 // pred_check
          %p488 = pneg %p98
        $region18: #{dqn_gru_cnn_pallas_batched.1} parent=11 // pred_check_branch
          %490 = sbr.rel (%p488) target = $region20
        $region19: #{dqn_gru_cnn_pallas_batched.1} parent=11 // pred_region
          _
        $region20: #{dqn_gru_cnn_pallas_batched.1} parent=11 // pred_fallthru
          _
        // Predicated region
        $region21: #{dqn_gru_cnn_pallas_batched.1} parent=11 // pred_check
          %p491 = pneg %p119
        $region22: #{dqn_gru_cnn_pallas_batched.1} parent=11 // pred_check_branch
          %493 = sbr.rel (%p491) target = $region24
        $region23: #{dqn_gru_cnn_pallas_batched.1} parent=11 // pred_region
          %495 = vsyncadd [#allocation3], 0
          %s496 = sshll.u32 %s3, 4
          %s497 = int_to_ptr.hbm [resolvable:$true] %s496
          %s498 = sshll.u32 [#allocation2], 4
          %s499 = int_to_ptr.vmem [resolvable:$true] %s498
          %504 = dma.hbm_to_vmem [thread:$0]  %s497, 8192, %s499, [#allocation3], 256, 256, 16
        $region24: #{dqn_gru_cnn_pallas_batched.1} parent=11 // pred_fallthru
          _
        // Predicated region
        $region25: #{dqn_gru_cnn_pallas_batched.1} parent=11 // pred_check
          %p505 = pneg %p140
        $region26: #{dqn_gru_cnn_pallas_batched.1} parent=11 // pred_check_branch
          %507 = sbr.rel (%p505) target = $region28
        $region27: #{dqn_gru_cnn_pallas_batched.1} parent=11 // pred_region
          _
        $region28: #{dqn_gru_cnn_pallas_batched.1} parent=11 // pred_fallthru
          _
        // Predicated region
        $region29: #{dqn_gru_cnn_pallas_batched.1} parent=11 // pred_check
          %p508 = pneg %p161
        $region30: #{dqn_gru_cnn_pallas_batched.1} parent=11 // pred_check_branch
          %510 = sbr.rel (%p508) target = $region32
        $region31: #{dqn_gru_cnn_pallas_batched.1} parent=11 // pred_region
          _
        $region32: #{dqn_gru_cnn_pallas_batched.1} parent=11 // pred_fallthru
          _
        // Predicated region
        $region33: #{dqn_gru_cnn_pallas_batched.1} parent=11 // pred_check
          %p511 = pneg %p182
        $region34: #{dqn_gru_cnn_pallas_batched.1} parent=11 // pred_check_branch
          %513 = sbr.rel (%p511) target = $region36
        $region35: #{dqn_gru_cnn_pallas_batched.1} parent=11 // pred_region
          _
        $region36: #{dqn_gru_cnn_pallas_batched.1} parent=11 // pred_fallthru
          _
        // Predicated region
        $region37: #{dqn_gru_cnn_pallas_batched.1} parent=11 // pred_check
          %p514 = pneg %p203
        $region38: #{dqn_gru_cnn_pallas_batched.1} parent=11 // pred_check_branch
          %516 = sbr.rel (%p514) target = $region40
        $region39: #{dqn_gru_cnn_pallas_batched.1} parent=11 // pred_region
          _
        $region40: #{dqn_gru_cnn_pallas_batched.1} parent=11 // pred_fallthru
          _
        // Predicated region
        $region41: #{dqn_gru_cnn_pallas_batched.1} parent=11 // pred_check
          %p517 = pneg %p224
        $region42: #{dqn_gru_cnn_pallas_batched.1} parent=11 // pred_check_branch
          %519 = sbr.rel (%p517) target = $region44
        $region43: #{dqn_gru_cnn_pallas_batched.1} parent=11 // pred_region
          _
        $region44: #{dqn_gru_cnn_pallas_batched.1} parent=11 // pred_fallthru
          _
        // Predicated region
        $region45: #{dqn_gru_cnn_pallas_batched.1} parent=11 // pred_check
          %p520 = pneg %p245
        $region46: #{dqn_gru_cnn_pallas_batched.1} parent=11 // pred_check_branch
          %522 = sbr.rel (%p520) target = $region48
        $region47: #{dqn_gru_cnn_pallas_batched.1} parent=11 // pred_region
          _
        $region48: #{dqn_gru_cnn_pallas_batched.1} parent=11 // pred_fallthru
          _
        // Predicated region
        $region49: #{dqn_gru_cnn_pallas_batched.1} parent=11 // pred_check
          %p523 = pneg %p266
        $region50: #{dqn_gru_cnn_pallas_batched.1} parent=11 // pred_check_branch
          %525 = sbr.rel (%p523) target = $region52
        $region51: #{dqn_gru_cnn_pallas_batched.1} parent=11 // pred_region
          _
        $region52: #{dqn_gru_cnn_pallas_batched.1} parent=11 // pred_fallthru
          _
        // Predicated region
        $region53: #{dqn_gru_cnn_pallas_batched.1} parent=11 // pred_check
          %p526 = pneg %p287
        $region54: #{dqn_gru_cnn_pallas_batched.1} parent=11 // pred_check_branch
          %528 = sbr.rel (%p526) target = $region56
        $region55: #{dqn_gru_cnn_pallas_batched.1} parent=11 // pred_region
          _
        $region56: #{dqn_gru_cnn_pallas_batched.1} parent=11 // pred_fallthru
          _
        // Predicated region
        $region57: #{dqn_gru_cnn_pallas_batched.1} parent=11 // pred_check
          %p529 = pneg %p308
        $region58: #{dqn_gru_cnn_pallas_batched.1} parent=11 // pred_check_branch
          %531 = sbr.rel (%p529) target = $region60
        $region59: #{dqn_gru_cnn_pallas_batched.1} parent=11 // pred_region
          _
        $region60: #{dqn_gru_cnn_pallas_batched.1} parent=11 // pred_fallthru
          _
        // Predicated region
        $region61: #{dqn_gru_cnn_pallas_batched.1} parent=11 // pred_check
          %p532 = pneg %p329
        $region62: #{dqn_gru_cnn_pallas_batched.1} parent=11 // pred_check_branch
          %534 = sbr.rel (%p532) target = $region64
        $region63: #{dqn_gru_cnn_pallas_batched.1} parent=11 // pred_region
          _
        $region64: #{dqn_gru_cnn_pallas_batched.1} parent=11 // pred_fallthru
          _
        // Predicated region
        $region65: #{dqn_gru_cnn_pallas_batched.1} parent=11 // pred_check
          %p535 = pneg %p350
        $region66: #{dqn_gru_cnn_pallas_batched.1} parent=11 // pred_check_branch
          %537 = sbr.rel (%p535) target = $region68
        $region67: #{dqn_gru_cnn_pallas_batched.1} parent=11 // pred_region
          _
        $region68: #{dqn_gru_cnn_pallas_batched.1} parent=11 // pred_fallthru
          _
        // Predicated region
        $region69: #{dqn_gru_cnn_pallas_batched.1} parent=11 // pred_check
          %p538 = pneg %p371
        $region70: #{dqn_gru_cnn_pallas_batched.1} parent=11 // pred_check_branch
          %540 = sbr.rel (%p538) target = $region72
        $region71: #{dqn_gru_cnn_pallas_batched.1} parent=11 // pred_region
          _
        $region72: #{dqn_gru_cnn_pallas_batched.1} parent=11 // pred_fallthru
          _
        // Predicated region
        $region73: #{dqn_gru_cnn_pallas_batched.1} parent=11 // pred_check
          %p541 = pneg %p392
        $region74: #{dqn_gru_cnn_pallas_batched.1} parent=11 // pred_check_branch
          %543 = sbr.rel (%p541) target = $region76
        $region75: #{dqn_gru_cnn_pallas_batched.1} parent=11 // pred_region
          _
        $region76: #{dqn_gru_cnn_pallas_batched.1} parent=11 // pred_fallthru
          _
      $region12: #{dqn_gru_cnn_pallas_batched.1} parent=5 // pred_fallthru
        _
      %p544 = scmp.lt.s32.totalorder %s30, 4
      // Predicated region
      $region77: #{dqn_gru_cnn_pallas_batched.1} parent=5 // pred_check
        %p545 = pneg %p544
      $region78: #{dqn_gru_cnn_pallas_batched.1} parent=5 // pred_check_branch
        %547 = sbr.rel (%p545) target = $region80
      $region79: #{dqn_gru_cnn_pallas_batched.1} parent=5 // pred_region
        // Predicated region
        $region81: #{dqn_gru_cnn_pallas_batched.1} parent=79 // pred_check
          %p548 = pneg %p50
        $region82: #{dqn_gru_cnn_pallas_batched.1} parent=79 // pred_check_branch
          %550 = sbr.rel (%p548) target = $region84
        $region83: #{dqn_gru_cnn_pallas_batched.1} parent=79 // pred_region
          %p551 = scmp.lt.s32.totalorder %s30, 3
          %s552 = scalar_select %p551, %s30, 3
          %s553 = smul.addr %s552, 8
          %s554 = scalar_lea.vmem %s0, %s553
        $region84: #{dqn_gru_cnn_pallas_batched.1} parent=79 // pred_fallthru
          _
        // Predicated region
        $region85: #{dqn_gru_cnn_pallas_batched.1} parent=79 // pred_check
          %p555 = pneg %p412
        $region86: #{dqn_gru_cnn_pallas_batched.1} parent=79 // pred_check_branch
          %557 = sbr.rel (%p555) target = $region88
        $region87: #{dqn_gru_cnn_pallas_batched.1} parent=79 // pred_region
          %p558 = scmp.lt.s32.totalorder %s30, 3
          %s559 = scalar_select %p558, %s30, 3
          %s560 = scalar_lea.vmem %s17, %s559
        $region88: #{dqn_gru_cnn_pallas_batched.1} parent=79 // pred_fallthru
          _
      $region80: #{dqn_gru_cnn_pallas_batched.1} parent=5 // pred_fallthru
        _
      %p561 = scmp.le.s32.totalorder 1, %s30
      %p562 = scmp.lt.s32.totalorder %s30, 5
      %p563 = pnand %p561, %p562
      %p564 = pneg %p563
      // Predicated region
      $region89: #{dqn_gru_cnn_pallas_batched.1} parent=5 // pred_check
        _
      $region90: #{dqn_gru_cnn_pallas_batched.1} parent=5 // pred_check_branch
        %566 = sbr.rel (%p563) target = $region92
      $region91: #{dqn_gru_cnn_pallas_batched.1} parent=5 // pred_region
        %s567 = ssub.s32 %s30, 1
        // Predicated region
        $region93: #{dqn_gru_cnn_pallas_batched.1} parent=91 // pred_check
          %p568 = pneg %p119
        $region94: #{dqn_gru_cnn_pallas_batched.1} parent=91 // pred_check_branch
          %570 = sbr.rel (%p568) target = $region96
        $region95: #{dqn_gru_cnn_pallas_batched.1} parent=91 // pred_region
          %572 = dma.done [#allocation3], 8192
        $region96: #{dqn_gru_cnn_pallas_batched.1} parent=91 // pred_fallthru
          _
        %p573 = scmp.lt.s32.totalorder %s35, 3
        %s574 = scalar_select %p573, %s35, 3
        %s575 = smul.addr %s574, 8
        %s576 = scalar_lea.vmem %s0, %s575
        %p577 = pneg %p56
        %p578 = pneg %p53
        %p579 = pneg %p77
        %p580 = pneg %p74
        %p581 = pneg %p98
        %p582 = pneg %p95
        %p583 = pneg %p119
        %p584 = pneg %p116
        %p585 = pneg %p140
        %p586 = pneg %p137
        %p587 = pneg %p161
        %p588 = pneg %p158
        %p589 = pneg %p182
        %p590 = pneg %p179
        %p591 = pneg %p203
        %p592 = pneg %p200
        %p593 = pneg %p224
        %p594 = pneg %p221
        %p595 = pneg %p245
        %p596 = pneg %p242
        %p597 = pneg %p266
        %p598 = pneg %p263
        %p599 = pneg %p287
        %p600 = pneg %p284
        %p601 = pneg %p308
        %p602 = pneg %p305
        %p603 = pneg %p329
        %p604 = pneg %p326
        %p605 = pneg %p350
        %p606 = pneg %p347
        %p607 = pneg %p371
        %p608 = pneg %p368
        %p609 = pneg %p392
        %p610 = pneg %p389
        %p611 = scmp.lt.s32.totalorder %s35, 3
        %s612 = scalar_select %p611, %s35, 3
        %s613 = scalar_lea.vmem %s17, %s612
        %p614 = pneg %p418
        %p615 = pneg %p415
        %p616 = pneg %p444
        %p617 = pneg %p441
        %p618 = scmp.lt.s32.totalorder %s35, 3
        %s619 = scalar_select %p618, %s35, 3
        %s620 = smul.addr %s619, 8
        %s621 = scalar_lea.vmem %s18, %s620
        %p622 = pneg %p470
        %p623 = pneg %p467
        %s624 = sand.u32 %s457, 1
        %s625 = scalar_lea.sflag [#allocation4], %s624
        %s626 = sand.u32 %s457, 1
        %s627 = scalar_lea.vmem [#allocation5], %s626
        %p628 = scmp.lt.s32.totalorder %s35, 3
        %s629 = scalar_select %p628, %s35, 3
        %s630 = smul.addr %s629, 8
        %s631 = scalar_lea.vmem %s0, %s630
        %p632 = scmp.lt.s32.totalorder %s35, 3
        %s633 = scalar_select %p632, %s35, 3
        %s634 = scalar_lea.vmem %s17, %s633
        %p635 = scmp.lt.s32.totalorder %s35, 3
        %s636 = scalar_select %p635, %s35, 3
        %s637 = smul.addr %s636, 8
        %s638 = scalar_lea.vmem %s18, %s637
        %v640 = vld [vmem:[%s631] sm:$0xff]
        %v641 = vpack.c.bf16 %v640, %v640
        %v642 = vld [vmem:[%s1] sm:$0xff]
        %v643 = vld [vmem:[%s1 + $0x8] sm:$0xff]
        %v644 = vld [vmem:[%s2] sm:$0x3]
        %v646 = vperm.slane %v644, 0
        %v647 = vperm.slane %v644, 1
        %v652 = vunpack.c.l.b16 %v642
        %v653 = vunpack.c.h.b16 %v642
        %v654 = vunpack.c.l.b16 %v643
        %v655 = vunpack.c.h.b16 %v643
        %v656 = vpack.c.b16 %v654, %v652
        %v657 = vpack.c.b16 %v655, %v653
        %vm660 = vcmask 130048
        %v662 = vsel %vm660, %v641, 0
        %664 = vmatpush.bf16.msra.mxu0 0
        %665 = vmatpush.bf16.msra.mxu0 0
        %666 = vmatpush.bf16.msra.mxu0 0
        %667 = vmatpush.bf16.msra.mxu0 0
        %668 = vmatpush.bf16.msra.mxu0 0
        %669 = vmatpush.bf16.msra.mxu0 0
        %670 = vmatpush.bf16.msra.mxu0 0
        %671 = vmatpush.bf16.msra.mxu0 %v656
        %672 = vmatmul.bf16.gmra.mxu0 %v662
        %v673 = vpop.f32.mrf.mxu0
        %v674 = vadd.f32 %v646, %v673
        %v675 = vpop.f32.mrf.mxu0
        %676 = vdwg.mxu0
        %677 = vmatpush.bf16.msra.mxu0 0
        %678 = vmatpush.bf16.msra.mxu0 0
        %679 = vmatpush.bf16.msra.mxu0 0
        %680 = vmatpush.bf16.msra.mxu0 0
        %681 = vmatpush.bf16.msra.mxu0 0
        %682 = vmatpush.bf16.msra.mxu0 0
        %683 = vmatpush.bf16.msra.mxu0 0
        %684 = vmatpush.bf16.msra.mxu0 %v657
        %685 = vmatmul.bf16.gmra.mxu0 %v662
        %v686 = vpop.f32.mrf.mxu0
        %v687 = vadd.f32 %v647, %v686
        %v688 = vpop.f32.mrf.mxu0
        %689 = vdwg.mxu0
        %v690 = vmax.f32 %v674, 0.0
        %v691 = vmax.f32 %v687, 0.0
        %v692 = vpack.c.bf16 %v690, %v690
        %v693 = vpack.c.bf16 %v691, %v691
        %v694 = vld [vmem:[#allocation2] sm:$0xff]
        %v695 = vld [vmem:[#allocation2 + $0x8] sm:$0xff]
        %v696 = vld [vmem:[#allocation2 + $0x10] sm:$0xff]
        %v697 = vld [vmem:[#allocation2 + $0x18] sm:$0xff]
        %v698 = vld [vmem:[#allocation2 + $0x20] sm:$0xff]
        %v699 = vld [vmem:[#allocation2 + $0x28] sm:$0xff]
        %v700 = vld [vmem:[#allocation2 + $0x30] sm:$0xff]
        %v701 = vld [vmem:[#allocation2 + $0x38] sm:$0xff]
        %v702 = vld [vmem:[#allocation2 + $0x40] sm:$0xff]
        %v703 = vld [vmem:[#allocation2 + $0x48] sm:$0xff]
        %v704 = vld [vmem:[#allocation2 + $0x50] sm:$0xff]
        %v705 = vld [vmem:[#allocation2 + $0x58] sm:$0xff]
        %v706 = vld [vmem:[#allocation2 + $0x60] sm:$0xff]
        %v707 = vld [vmem:[#allocation2 + $0x68] sm:$0xff]
        %v708 = vld [vmem:[#allocation2 + $0x70] sm:$0xff]
        %v709 = vld [vmem:[#allocation2 + $0x78] sm:$0xff]
        %v710 = vld [vmem:[#allocation2 + $0x80] sm:$0xff]
        %v711 = vld [vmem:[#allocation2 + $0x88] sm:$0xff]
        %v712 = vld [vmem:[#allocation2 + $0x90] sm:$0xff]
        %v713 = vld [vmem:[#allocation2 + $0x98] sm:$0xff]
        %v714 = vld [vmem:[#allocation2 + $0xa0] sm:$0xff]
        %v715 = vld [vmem:[#allocation2 + $0xa8] sm:$0xff]
        %v716 = vld [vmem:[#allocation2 + $0xb0] sm:$0xff]
        %v717 = vld [vmem:[#allocation2 + $0xb8] sm:$0xff]
        %v718 = vld [vmem:[#allocation2 + $0xc0] sm:$0xff]
        %v719 = vld [vmem:[#allocation2 + $0xc8] sm:$0xff]
        %v720 = vld [vmem:[#allocation2 + $0xd0] sm:$0xff]
        %v721 = vld [vmem:[#allocation2 + $0xd8] sm:$0xff]
        %v722 = vld [vmem:[#allocation2 + $0xe0] sm:$0xff]
        %v723 = vld [vmem:[#allocation2 + $0xe8] sm:$0xff]
        %v724 = vld [vmem:[#allocation2 + $0xf0] sm:$0xff]
        %v725 = vld [vmem:[#allocation2 + $0xf8] sm:$0xff]
        %v726 = vld [vmem:[#allocation2 + $0x100] sm:$0xff]
        %v727 = vld [vmem:[#allocation2 + $0x108] sm:$0xff]
        %v728 = vld [vmem:[#allocation2 + $0x110] sm:$0xff]
        %v729 = vld [vmem:[#allocation2 + $0x118] sm:$0xff]
        %v730 = vld [vmem:[#allocation2 + $0x120] sm:$0xff]
        %v731 = vld [vmem:[#allocation2 + $0x128] sm:$0xff]
        %v732 = vld [vmem:[#allocation2 + $0x130] sm:$0xff]
        %v733 = vld [vmem:[#allocation2 + $0x138] sm:$0xff]
        %v734 = vld [vmem:[#allocation2 + $0x140] sm:$0xff]
        %v735 = vld [vmem:[#allocation2 + $0x148] sm:$0xff]
        %v736 = vld [vmem:[#allocation2 + $0x150] sm:$0xff]
        %v737 = vld [vmem:[#allocation2 + $0x158] sm:$0xff]
        %v738 = vld [vmem:[#allocation2 + $0x160] sm:$0xff]
        %v739 = vld [vmem:[#allocation2 + $0x168] sm:$0xff]
        %v740 = vld [vmem:[#allocation2 + $0x170] sm:$0xff]
        %v741 = vld [vmem:[#allocation2 + $0x178] sm:$0xff]
        %v742 = vld [vmem:[#allocation2 + $0x180] sm:$0xff]
        %v743 = vld [vmem:[#allocation2 + $0x188] sm:$0xff]
        %v744 = vld [vmem:[#allocation2 + $0x190] sm:$0xff]
        %v745 = vld [vmem:[#allocation2 + $0x198] sm:$0xff]
        %v746 = vld [vmem:[#allocation2 + $0x1a0] sm:$0xff]
        %v747 = vld [vmem:[#allocation2 + $0x1a8] sm:$0xff]
        %v748 = vld [vmem:[#allocation2 + $0x1b0] sm:$0xff]
        %v749 = vld [vmem:[#allocation2 + $0x1b8] sm:$0xff]
        %v750 = vld [vmem:[#allocation2 + $0x1c0] sm:$0xff]
        %v751 = vld [vmem:[#allocation2 + $0x1c8] sm:$0xff]
        %v752 = vld [vmem:[#allocation2 + $0x1d0] sm:$0xff]
        %v753 = vld [vmem:[#allocation2 + $0x1d8] sm:$0xff]
        %v754 = vld [vmem:[#allocation2 + $0x1e0] sm:$0xff]
        %v755 = vld [vmem:[#allocation2 + $0x1e8] sm:$0xff]
        %v756 = vld [vmem:[#allocation2 + $0x1f0] sm:$0xff]
        %v757 = vld [vmem:[#allocation2 + $0x1f8] sm:$0xff]
        %v822 = vunpack.c.l.b16 %v694
        %v823 = vunpack.c.h.b16 %v694
        %v824 = vunpack.c.l.b16 %v695
        %v825 = vunpack.c.h.b16 %v695
        %v826 = vunpack.c.l.b16 %v696
        %v827 = vunpack.c.h.b16 %v696
        %v828 = vunpack.c.l.b16 %v697
        %v829 = vunpack.c.h.b16 %v697
        %v830 = vunpack.c.l.b16 %v698
        %v831 = vunpack.c.h.b16 %v698
        %v832 = vunpack.c.l.b16 %v699
        %v833 = vunpack.c.h.b16 %v699
        %v834 = vunpack.c.l.b16 %v700
        %v835 = vunpack.c.h.b16 %v700
        %v836 = vunpack.c.l.b16 %v701
        %v837 = vunpack.c.h.b16 %v701
        %v838 = vunpack.c.l.b16 %v702
        %v839 = vunpack.c.h.b16 %v702
        %v840 = vunpack.c.l.b16 %v703
        %v841 = vunpack.c.h.b16 %v703
        %v842 = vunpack.c.l.b16 %v704
        %v843 = vunpack.c.h.b16 %v704
        %v844 = vunpack.c.l.b16 %v705
        %v845 = vunpack.c.h.b16 %v705
        %v846 = vunpack.c.l.b16 %v706
        %v847 = vunpack.c.h.b16 %v706
        %v848 = vunpack.c.l.b16 %v707
        %v849 = vunpack.c.h.b16 %v707
        %v850 = vunpack.c.l.b16 %v708
        %v851 = vunpack.c.h.b16 %v708
        %v852 = vunpack.c.l.b16 %v709
        %v853 = vunpack.c.h.b16 %v709
        %v854 = vunpack.c.l.b16 %v710
        %v855 = vunpack.c.h.b16 %v710
        %v856 = vunpack.c.l.b16 %v711
        %v857 = vunpack.c.h.b16 %v711
        %v858 = vunpack.c.l.b16 %v712
        %v859 = vunpack.c.h.b16 %v712
        %v860 = vunpack.c.l.b16 %v713
        %v861 = vunpack.c.h.b16 %v713
        %v862 = vunpack.c.l.b16 %v714
        %v863 = vunpack.c.h.b16 %v714
        %v864 = vunpack.c.l.b16 %v715
        %v865 = vunpack.c.h.b16 %v715
        %v866 = vunpack.c.l.b16 %v716
        %v867 = vunpack.c.h.b16 %v716
        %v868 = vunpack.c.l.b16 %v717
        %v869 = vunpack.c.h.b16 %v717
        %v870 = vunpack.c.l.b16 %v718
        %v871 = vunpack.c.h.b16 %v718
        %v872 = vunpack.c.l.b16 %v719
        %v873 = vunpack.c.h.b16 %v719
        %v874 = vunpack.c.l.b16 %v720
        %v875 = vunpack.c.h.b16 %v720
        %v876 = vunpack.c.l.b16 %v721
        %v877 = vunpack.c.h.b16 %v721
        %v878 = vunpack.c.l.b16 %v722
        %v879 = vunpack.c.h.b16 %v722
        %v880 = vunpack.c.l.b16 %v723
        %v881 = vunpack.c.h.b16 %v723
        %v882 = vunpack.c.l.b16 %v724
        %v883 = vunpack.c.h.b16 %v724
        %v884 = vunpack.c.l.b16 %v725
        %v885 = vunpack.c.h.b16 %v725
        %v886 = vunpack.c.l.b16 %v726
        %v887 = vunpack.c.h.b16 %v726
        %v888 = vunpack.c.l.b16 %v727
        %v889 = vunpack.c.h.b16 %v727
        %v890 = vunpack.c.l.b16 %v728
        %v891 = vunpack.c.h.b16 %v728
        %v892 = vunpack.c.l.b16 %v729
        %v893 = vunpack.c.h.b16 %v729
        %v894 = vunpack.c.l.b16 %v730
        %v895 = vunpack.c.h.b16 %v730
        %v896 = vunpack.c.l.b16 %v731
        %v897 = vunpack.c.h.b16 %v731
        %v898 = vunpack.c.l.b16 %v732
        %v899 = vunpack.c.h.b16 %v732
        %v900 = vunpack.c.l.b16 %v733
        %v901 = vunpack.c.h.b16 %v733
        %v902 = vunpack.c.l.b16 %v734
        %v903 = vunpack.c.h.b16 %v734
        %v904 = vunpack.c.l.b16 %v735
        %v905 = vunpack.c.h.b16 %v735
        %v906 = vunpack.c.l.b16 %v736
        %v907 = vunpack.c.h.b16 %v736
        %v908 = vunpack.c.l.b16 %v737
        %v909 = vunpack.c.h.b16 %v737
        %v910 = vunpack.c.l.b16 %v738
        %v911 = vunpack.c.h.b16 %v738
        %v912 = vunpack.c.l.b16 %v739
        %v913 = vunpack.c.h.b16 %v739
        %v914 = vunpack.c.l.b16 %v740
        %v915 = vunpack.c.h.b16 %v740
        %v916 = vunpack.c.l.b16 %v741
        %v917 = vunpack.c.h.b16 %v741
        %v918 = vunpack.c.l.b16 %v742
        %v919 = vunpack.c.h.b16 %v742
        %v920 = vunpack.c.l.b16 %v743
        %v921 = vunpack.c.h.b16 %v743
        %v922 = vunpack.c.l.b16 %v744
        %v923 = vunpack.c.h.b16 %v744
        %v924 = vunpack.c.l.b16 %v745
        %v925 = vunpack.c.h.b16 %v745
        %v926 = vunpack.c.l.b16 %v746
        %v927 = vunpack.c.h.b16 %v746
        %v928 = vunpack.c.l.b16 %v747
        %v929 = vunpack.c.h.b16 %v747
        %v930 = vunpack.c.l.b16 %v748
        %v931 = vunpack.c.h.b16 %v748
        %v932 = vunpack.c.l.b16 %v749
        %v933 = vunpack.c.h.b16 %v749
        %v934 = vunpack.c.l.b16 %v750
        %v935 = vunpack.c.h.b16 %v750
        %v936 = vunpack.c.l.b16 %v751
        %v937 = vunpack.c.h.b16 %v751
        %v938 = vunpack.c.l.b16 %v752
        %v939 = vunpack.c.h.b16 %v752
        %v940 = vunpack.c.l.b16 %v753
        %v941 = vunpack.c.h.b16 %v753
        %v942 = vunpack.c.l.b16 %v754
        %v943 = vunpack.c.h.b16 %v754
        %v944 = vunpack.c.l.b16 %v755
        %v945 = vunpack.c.h.b16 %v755
        %v946 = vunpack.c.l.b16 %v756
        %v947 = vunpack.c.h.b16 %v756
        %v948 = vunpack.c.l.b16 %v757
        %v949 = vunpack.c.h.b16 %v757
        %v950 = vpack.c.b16 %v826, %v822
        %v951 = vpack.c.b16 %v827, %v823
        %v952 = vpack.c.b16 %v828, %v824
        %v953 = vpack.c.b16 %v829, %v825
        %v954 = vpack.c.b16 %v834, %v830
        %v955 = vpack.c.b16 %v835, %v831
        %v956 = vpack.c.b16 %v836, %v832
        %v957 = vpack.c.b16 %v837, %v833
        %v958 = vpack.c.b16 %v842, %v838
        %v959 = vpack.c.b16 %v843, %v839
        %v960 = vpack.c.b16 %v844, %v840
        %v961 = vpack.c.b16 %v845, %v841
        %v962 = vpack.c.b16 %v850, %v846
        %v963 = vpack.c.b16 %v851, %v847
        %v964 = vpack.c.b16 %v852, %v848
        %v965 = vpack.c.b16 %v853, %v849
        %v966 = vpack.c.b16 %v858, %v854
        %v967 = vpack.c.b16 %v859, %v855
        %v968 = vpack.c.b16 %v860, %v856
        %v969 = vpack.c.b16 %v861, %v857
        %v970 = vpack.c.b16 %v866, %v862
        %v971 = vpack.c.b16 %v867, %v863
        %v972 = vpack.c.b16 %v868, %v864
        %v973 = vpack.c.b16 %v869, %v865
        %v974 = vpack.c.b16 %v874, %v870
        %v975 = vpack.c.b16 %v875, %v871
        %v976 = vpack.c.b16 %v876, %v872
        %v977 = vpack.c.b16 %v877, %v873
        %v978 = vpack.c.b16 %v882, %v878
        %v979 = vpack.c.b16 %v883, %v879
        %v980 = vpack.c.b16 %v884, %v880
        %v981 = vpack.c.b16 %v885, %v881
        %v982 = vpack.c.b16 %v890, %v886
        %v983 = vpack.c.b16 %v891, %v887
        %v984 = vpack.c.b16 %v892, %v888
        %v985 = vpack.c.b16 %v893, %v889
        %v986 = vpack.c.b16 %v898, %v894
        %v987 = vpack.c.b16 %v899, %v895
        %v988 = vpack.c.b16 %v900, %v896
        %v989 = vpack.c.b16 %v901, %v897
        %v990 = vpack.c.b16 %v906, %v902
        %v991 = vpack.c.b16 %v907, %v903
        %v992 = vpack.c.b16 %v908, %v904
        %v993 = vpack.c.b16 %v909, %v905
        %v994 = vpack.c.b16 %v914, %v910
        %v995 = vpack.c.b16 %v915, %v911
        %v996 = vpack.c.b16 %v916, %v912
        %v997 = vpack.c.b16 %v917, %v913
        %v998 = vpack.c.b16 %v922, %v918
        %v999 = vpack.c.b16 %v923, %v919
        %v1000 = vpack.c.b16 %v924, %v920
        %v1001 = vpack.c.b16 %v925, %v921
        %v1002 = vpack.c.b16 %v930, %v926
        %v1003 = vpack.c.b16 %v931, %v927
        %v1004 = vpack.c.b16 %v932, %v928
        %v1005 = vpack.c.b16 %v933, %v929
        %v1006 = vpack.c.b16 %v938, %v934
        %v1007 = vpack.c.b16 %v939, %v935
        %v1008 = vpack.c.b16 %v940, %v936
        %v1009 = vpack.c.b16 %v941, %v937
        %v1010 = vpack.c.b16 %v946, %v942
        %v1011 = vpack.c.b16 %v947, %v943
        %v1012 = vpack.c.b16 %v948, %v944
        %v1013 = vpack.c.b16 %v949, %v945
        %1078 = vmatpush.bf16.msra.mxu0 %v978
        %1079 = vmatpush.bf16.msra.mxu0 %v974
        %1080 = vmatpush.bf16.msra.mxu0 %v970
        %1081 = vmatpush.bf16.msra.mxu0 %v966
        %1082 = vmatpush.bf16.msra.mxu0 %v962
        %1083 = vmatpush.bf16.msra.mxu0 %v958
        %1084 = vmatpush.bf16.msra.mxu0 %v954
        %1085 = vmatpush.bf16.msra.mxu0 %v950
        %1086 = vmatmul.bf16.gmra.mxu0 %v692
        %v1087 = vpop.f32.mrf.mxu0
        %v1088 = vadd.f32 0.0, %v1087
        %v1089 = vpop.f32.mrf.mxu0
        %1090 = vdwg.mxu0
        %1091 = vmatpush.bf16.msra.mxu0 %v1010
        %1092 = vmatpush.bf16.msra.mxu0 %v1006
        %1093 = vmatpush.bf16.msra.mxu0 %v1002
        %1094 = vmatpush.bf16.msra.mxu0 %v998
        %1095 = vmatpush.bf16.msra.mxu0 %v994
        %1096 = vmatpush.bf16.msra.mxu0 %v990
        %1097 = vmatpush.bf16.msra.mxu0 %v986
        %1098 = vmatpush.bf16.msra.mxu0 %v982
        %1099 = vmatmul.bf16.gmra.mxu0 %v693
        %v1100 = vpop.f32.mrf.mxu0
        %v1101 = vadd.f32 %v1088, %v1100
        %v1102 = vpop.f32.mrf.mxu0
        %1103 = vdwg.mxu0
        %1104 = vmatpush.bf16.msra.mxu0 %v979
        %1105 = vmatpush.bf16.msra.mxu0 %v975
        %1106 = vmatpush.bf16.msra.mxu0 %v971
        %1107 = vmatpush.bf16.msra.mxu0 %v967
        %1108 = vmatpush.bf16.msra.mxu0 %v963
        %1109 = vmatpush.bf16.msra.mxu0 %v959
        %1110 = vmatpush.bf16.msra.mxu0 %v955
        %1111 = vmatpush.bf16.msra.mxu0 %v951
        %1112 = vmatmul.bf16.gmra.mxu0 %v692
        %v1113 = vpop.f32.mrf.mxu0
        %v1114 = vadd.f32 0.0, %v1113
        %v1115 = vpop.f32.mrf.mxu0
        %1116 = vdwg.mxu0
        %1117 = vmatpush.bf16.msra.mxu0 %v1011
        %1118 = vmatpush.bf16.msra.mxu0 %v1007
        %1119 = vmatpush.bf16.msra.mxu0 %v1003
        %1120 = vmatpush.bf16.msra.mxu0 %v999
        %1121 = vmatpush.bf16.msra.mxu0 %v995
        %1122 = vmatpush.bf16.msra.mxu0 %v991
        %1123 = vmatpush.bf16.msra.mxu0 %v987
        %1124 = vmatpush.bf16.msra.mxu0 %v983
        %1125 = vmatmul.bf16.gmra.mxu0 %v693
        %v1126 = vpop.f32.mrf.mxu0
        %v1127 = vadd.f32 %v1114, %v1126
        %v1128 = vpop.f32.mrf.mxu0
        %1129 = vdwg.mxu0
        %1130 = vmatpush.bf16.msra.mxu0 %v980
        %1131 = vmatpush.bf16.msra.mxu0 %v976
        %1132 = vmatpush.bf16.msra.mxu0 %v972
        %1133 = vmatpush.bf16.msra.mxu0 %v968
        %1134 = vmatpush.bf16.msra.mxu0 %v964
        %1135 = vmatpush.bf16.msra.mxu0 %v960
        %1136 = vmatpush.bf16.msra.mxu0 %v956
        %1137 = vmatpush.bf16.msra.mxu0 %v952
        %1138 = vmatmul.bf16.gmra.mxu0 %v692
        %v1139 = vpop.f32.mrf.mxu0
        %v1140 = vadd.f32 0.0, %v1139
        %v1141 = vpop.f32.mrf.mxu0
        %1142 = vdwg.mxu0
        %1143 = vmatpush.bf16.msra.mxu0 %v1012
        %1144 = vmatpush.bf16.msra.mxu0 %v1008
        %1145 = vmatpush.bf16.msra.mxu0 %v1004
        %1146 = vmatpush.bf16.msra.mxu0 %v1000
        %1147 = vmatpush.bf16.msra.mxu0 %v996
        %1148 = vmatpush.bf16.msra.mxu0 %v992
        %1149 = vmatpush.bf16.msra.mxu0 %v988
        %1150 = vmatpush.bf16.msra.mxu0 %v984
        %1151 = vmatmul.bf16.gmra.mxu0 %v693
        %v1152 = vpop.f32.mrf.mxu0
        %v1153 = vadd.f32 %v1140, %v1152
        %v1154 = vpop.f32.mrf.mxu0
        %1155 = vdwg.mxu0
        %1156 = vmatpush.bf16.msra.mxu0 %v981
        %1157 = vmatpush.bf16.msra.mxu0 %v977
        %1158 = vmatpush.bf16.msra.mxu0 %v973
        %1159 = vmatpush.bf16.msra.mxu0 %v969
        %1160 = vmatpush.bf16.msra.mxu0 %v965
        %1161 = vmatpush.bf16.msra.mxu0 %v961
        %1162 = vmatpush.bf16.msra.mxu0 %v957
        %1163 = vmatpush.bf16.msra.mxu0 %v953
        %1164 = vmatmul.bf16.gmra.mxu0 %v692
        %v1165 = vpop.f32.mrf.mxu0
        %v1166 = vadd.f32 0.0, %v1165
        %v1167 = vpop.f32.mrf.mxu0
        %1168 = vdwg.mxu0
        %1169 = vmatpush.bf16.msra.mxu0 %v1013
        %1170 = vmatpush.bf16.msra.mxu0 %v1009
        %1171 = vmatpush.bf16.msra.mxu0 %v1005
        %1172 = vmatpush.bf16.msra.mxu0 %v1001
        %1173 = vmatpush.bf16.msra.mxu0 %v997
        %1174 = vmatpush.bf16.msra.mxu0 %v993
        %1175 = vmatpush.bf16.msra.mxu0 %v989
        %1176 = vmatpush.bf16.msra.mxu0 %v985
        %1177 = vmatmul.bf16.gmra.mxu0 %v693
        %v1178 = vpop.f32.mrf.mxu0
        %v1179 = vadd.f32 %v1166, %v1178
        %v1180 = vpop.f32.mrf.mxu0
        %1181 = vdwg.mxu0
        %v1182 = vmax.f32 %v1101, %v1153
        %v1183 = vmax.f32 %v1127, %v1179
        %v1184 = vld [vmem:[%s4] sm:$0x3]
        %v1186 = vperm.slane %v1184, 0
        %v1187 = vperm.slane %v1184, 1
        %v1190 = vadd.f32 %v1182, %v1186
        %v1191 = vadd.f32 %v1183, %v1187
        %v1192 = vmax.f32 %v1190, 0.0
        %v1193 = vmax.f32 %v1191, 0.0
        %v1194 = vld [vmem:[%s5] sm:$0xff]
        %v1195 = vld [vmem:[%s5 + $0x8] sm:$0xff]
        %v1196 = vld [vmem:[%s5 + $0x10] sm:$0xff]
        %v1197 = vld [vmem:[%s5 + $0x18] sm:$0xff]
        %v1198 = vld [vmem:[%s5 + $0x20] sm:$0xff]
        %v1199 = vld [vmem:[%s5 + $0x28] sm:$0xff]
        %v1200 = vld [vmem:[%s5 + $0x30] sm:$0xff]
        %v1201 = vld [vmem:[%s5 + $0x38] sm:$0xff]
        %v1202 = vld [vmem:[%s5 + $0x40] sm:$0xff]
        %v1203 = vld [vmem:[%s5 + $0x48] sm:$0xff]
        %v1204 = vld [vmem:[%s5 + $0x50] sm:$0xff]
        %v1205 = vld [vmem:[%s5 + $0x58] sm:$0xff]
        %v1206 = vld [vmem:[%s5 + $0x60] sm:$0xff]
        %v1207 = vld [vmem:[%s5 + $0x68] sm:$0xff]
        %v1208 = vld [vmem:[%s5 + $0x70] sm:$0xff]
        %v1209 = vld [vmem:[%s5 + $0x78] sm:$0xff]
        %v1210 = vld [vmem:[%s5 + $0x80] sm:$0xff]
        %v1211 = vld [vmem:[%s5 + $0x88] sm:$0xff]
        %v1212 = vld [vmem:[%s5 + $0x90] sm:$0xff]
        %v1213 = vld [vmem:[%s5 + $0x98] sm:$0xff]
        %v1214 = vld [vmem:[%s5 + $0xa0] sm:$0xff]
        %v1215 = vld [vmem:[%s5 + $0xa8] sm:$0xff]
        %v1216 = vld [vmem:[%s5 + $0xb0] sm:$0xff]
        %v1217 = vld [vmem:[%s5 + $0xb8] sm:$0xff]
        %v1218 = vld [vmem:[%s5 + $0xc0] sm:$0xff]
        %v1219 = vld [vmem:[%s5 + $0xc8] sm:$0xff]
        %v1220 = vld [vmem:[%s5 + $0xd0] sm:$0xff]
        %v1221 = vld [vmem:[%s5 + $0xd8] sm:$0xff]
        %v1222 = vld [vmem:[%s5 + $0xe0] sm:$0xff]
        %v1223 = vld [vmem:[%s5 + $0xe8] sm:$0xff]
        %v1224 = vld [vmem:[%s5 + $0xf0] sm:$0xff]
        %v1225 = vld [vmem:[%s5 + $0xf8] sm:$0xff]
        %v1226 = vld [vmem:[%s6] sm:$0x1]
        %v1228 = vperm.slane %v1226, 0
        %1230 = vmatpush.msra.mxu0 %v1209
        %1231 = vmatpush.msra.mxu0 %v1208
        %1232 = vmatpush.msra.mxu0 %v1207
        %1233 = vmatpush.msra.mxu0 %v1206
        %1234 = vmatpush.msra.mxu0 %v1205
        %1235 = vmatpush.msra.mxu0 %v1204
        %1236 = vmatpush.msra.mxu0 %v1203
        %1237 = vmatpush.msra.mxu0 %v1202
        %1238 = vmatpush.msra.mxu0 %v1201
        %1239 = vmatpush.msra.mxu0 %v1200
        %1240 = vmatpush.msra.mxu0 %v1199
        %1241 = vmatpush.msra.mxu0 %v1198
        %1242 = vmatpush.msra.mxu0 %v1197
        %1243 = vmatpush.msra.mxu0 %v1196
        %1244 = vmatpush.msra.mxu0 %v1195
        %1245 = vmatpush.msra.mxu0 %v1194
        %1246 = vmatmul.f32.gmra.mxu0 %v1192
        %v1247 = vpop.f32.mrf.mxu0
        %v1248 = vadd.f32 %v1228, %v1247
        %1249 = vdwg.mxu0
        %1250 = vmatpush.msra.mxu0 %v1225
        %1251 = vmatpush.msra.mxu0 %v1224
        %1252 = vmatpush.msra.mxu0 %v1223
        %1253 = vmatpush.msra.mxu0 %v1222
        %1254 = vmatpush.msra.mxu0 %v1221
        %1255 = vmatpush.msra.mxu0 %v1220
        %1256 = vmatpush.msra.mxu0 %v1219
        %1257 = vmatpush.msra.mxu0 %v1218
        %1258 = vmatpush.msra.mxu0 %v1217
        %1259 = vmatpush.msra.mxu0 %v1216
        %1260 = vmatpush.msra.mxu0 %v1215
        %1261 = vmatpush.msra.mxu0 %v1214
        %1262 = vmatpush.msra.mxu0 %v1213
        %1263 = vmatpush.msra.mxu0 %v1212
        %1264 = vmatpush.msra.mxu0 %v1211
        %1265 = vmatpush.msra.mxu0 %v1210
        %1266 = vmatmul.f32.gmra.mxu0 %v1193
        %v1267 = vpop.f32.mrf.mxu0
        %v1268 = vadd.f32 %v1248, %v1267
        %1269 = vdwg.mxu0
        %v1270 = vmax.f32 %v1268, 0.0
        %v1271 = vld [vmem:[%s7] sm:$0xff]
        %v1272 = vld [vmem:[%s7 + $0x8] sm:$0xff]
        %v1273 = vld [vmem:[%s7 + $0x10] sm:$0xff]
        %v1274 = vld [vmem:[%s7 + $0x18] sm:$0xff]
        %v1275 = vld [vmem:[%s8] sm:$0x1]
        %v1277 = vperm.slane %v1275, 0
        %vm1279 = vcmask 261120
        %v1281 = vsel %vm1279, %v1270, 0
        %1283 = vmatpush.msra.mxu0 0.0
        %1284 = vmatpush.msra.mxu0 0.0
        %1285 = vmatpush.msra.mxu0 0.0
        %1286 = vmatpush.msra.mxu0 0.0
        %1287 = vmatpush.msra.mxu0 0.0
        %1288 = vmatpush.msra.mxu0 0.0
        %1289 = vmatpush.msra.mxu0 0.0
        %1290 = vmatpush.msra.mxu0 0.0
        %1291 = vmatpush.msra.mxu0 0.0
        %1292 = vmatpush.msra.mxu0 0.0
        %1293 = vmatpush.msra.mxu0 0.0
        %1294 = vmatpush.msra.mxu0 0.0
        %1295 = vmatpush.msra.mxu0 %v1274
        %1296 = vmatpush.msra.mxu0 %v1273
        %1297 = vmatpush.msra.mxu0 %v1272
        %1298 = vmatpush.msra.mxu0 %v1271
        %1299 = vmatmul.f32.gmra.mxu0 %v1281
        %v1300 = vpop.f32.mrf.mxu0
        %v1301 = vadd.f32 %v1277, %v1300
        %1302 = vdwg.mxu0
        %v1303 = vmax.f32 %v1301, 0.0
        %v1304 = vld [vmem:[%s9] sm:$0xff]
        %v1305 = vld [vmem:[%s9 + $0x8] sm:$0xff]
        %v1306 = vld [vmem:[%s9 + $0x10] sm:$0xff]
        %v1307 = vld [vmem:[%s9 + $0x18] sm:$0xff]
        %v1308 = vld [vmem:[%s10] sm:$0x1]
        %v1310 = vperm.slane %v1308, 0
        %v1313 = vsel %vm1279, %v1303, 0
        %1315 = vmatpush.msra.mxu0 0.0
        %1316 = vmatpush.msra.mxu0 0.0
        %1317 = vmatpush.msra.mxu0 0.0
        %1318 = vmatpush.msra.mxu0 0.0
        %1319 = vmatpush.msra.mxu0 0.0
        %1320 = vmatpush.msra.mxu0 0.0
        %1321 = vmatpush.msra.mxu0 0.0
        %1322 = vmatpush.msra.mxu0 0.0
        %1323 = vmatpush.msra.mxu0 0.0
        %1324 = vmatpush.msra.mxu0 0.0
        %1325 = vmatpush.msra.mxu0 0.0
        %1326 = vmatpush.msra.mxu0 0.0
        %1327 = vmatpush.msra.mxu0 %v1307
        %1328 = vmatpush.msra.mxu0 %v1306
        %1329 = vmatpush.msra.mxu0 %v1305
        %1330 = vmatpush.msra.mxu0 %v1304
        %1331 = vmatmul.f32.gmra.mxu0 %v1313
        %v1332 = vpop.f32.mrf.mxu0
        %v1333 = vadd.f32 %v1310, %v1332
        %1334 = vdwg.mxu0
        %v1335 = vmax.f32 %v1333, 0.0
        %v1336 = vld [vmem:[%s11] sm:$0xff]
        %v1337 = vld [vmem:[%s11 + $0x8] sm:$0xff]
        %v1338 = vld [vmem:[%s11 + $0x10] sm:$0xff]
        %v1339 = vld [vmem:[%s11 + $0x18] sm:$0xff]
        %v1340 = vld [vmem:[%s13] sm:$0x1]
        %v1342 = vperm.slane %v1340, 0
        %v1345 = vsel %vm1279, %v1335, 0
        %1347 = vmatpush.msra.mxu0 0.0
        %1348 = vmatpush.msra.mxu0 0.0
        %1349 = vmatpush.msra.mxu0 0.0
        %1350 = vmatpush.msra.mxu0 0.0
        %1351 = vmatpush.msra.mxu0 0.0
        %1352 = vmatpush.msra.mxu0 0.0
        %1353 = vmatpush.msra.mxu0 0.0
        %1354 = vmatpush.msra.mxu0 0.0
        %1355 = vmatpush.msra.mxu0 0.0
        %1356 = vmatpush.msra.mxu0 0.0
        %1357 = vmatpush.msra.mxu0 0.0
        %1358 = vmatpush.msra.mxu0 0.0
        %1359 = vmatpush.msra.mxu0 %v1339
        %1360 = vmatpush.msra.mxu0 %v1338
        %1361 = vmatpush.msra.mxu0 %v1337
        %1362 = vmatpush.msra.mxu0 %v1336
        %1363 = vmatmul.f32.gmra.mxu0 %v1345
        %v1364 = vpop.f32.mrf.mxu0
        %v1365 = vadd.f32 %v1342, %v1364
        %1366 = vdwg.mxu0
        %v1367 = vld [vmem:[%s12] sm:$0xff]
        %v1368 = vld [vmem:[%s12 + $0x8] sm:$0xff]
        %v1369 = vld [vmem:[%s12 + $0x10] sm:$0xff]
        %v1370 = vld [vmem:[%s12 + $0x18] sm:$0xff]
        %v1371 = vld [vmem:[%s14] sm:$0x1]
        %v1372 = vld [vmem:[%s634] sm:$0x1]
        %v1374 = vsel %vm1279, %v1372, 0
        %1376 = vmatpush.msra.mxu0 0.0
        %1377 = vmatpush.msra.mxu0 0.0
        %1378 = vmatpush.msra.mxu0 0.0
        %1379 = vmatpush.msra.mxu0 0.0
        %1380 = vmatpush.msra.mxu0 0.0
        %1381 = vmatpush.msra.mxu0 0.0
        %1382 = vmatpush.msra.mxu0 0.0
        %1383 = vmatpush.msra.mxu0 0.0
        %1384 = vmatpush.msra.mxu0 0.0
        %1385 = vmatpush.msra.mxu0 0.0
        %1386 = vmatpush.msra.mxu0 0.0
        %1387 = vmatpush.msra.mxu0 0.0
        %1388 = vmatpush.msra.mxu0 %v1370
        %1389 = vmatpush.msra.mxu0 %v1369
        %1390 = vmatpush.msra.mxu0 %v1368
        %1391 = vmatpush.msra.mxu0 %v1367
        %1392 = vmatmul.f32.gmra.mxu0 %v1374
        %v1393 = vpop.f32.mrf.mxu0
        %v1394 = vadd.f32 %v1371, %v1393
        %1395 = vdwg.mxu0
        %v1396 = vadd.f32 %v1365, %v1394
        %v1397 = vxor.u32 %v1396, 2147483648
        %v1398 = vmul.f32 %v1397, 1.442695
        %v1399 = vpow.pop %v1398
        %v1400 = vadd.f32 %v1399, 1.0
        %v1401 = vrcp.pop %v1400
        %v1402 = vmul.f32 %v1400, %v1401
        %v1403 = vsub.f32 1.0, %v1402
        %v1404 = vmul.f32 %v1401, %v1403
        %v1405 = vadd.f32 %v1401, %v1404
        %vm1406 = vweird.f32 %v1400
        %vm1407 = vweird.f32 %v1401
        %vm1408 = vmor %vm1406, %vm1407
        %v1409 = vsel %vm1408, %v1401, %v1405
        %v1410 = vand.u32 2147483647, %v1400
        %vm1411 = vcmp.eq.f32.partialorder %v1410, 8.507059e+37
        %v1412 = vand.u32 %v1400, 2147483648
        %v1413 = vor.u32 1.1754944e-38, %v1412
        %v1414 = vsel %vm1411, %v1413, %v1409
        %v1415 = vmul.f32 1.0, %v1414
        %1417 = vrot.lane.b32.xlu0 %v1394, 64
        %v1418 = vpop.permute.xlu0 %1417
        %v1420 = vmul.f32 %v1415, %v1418
        %1422 = vrot.lane.b32.xlu0 %v1420, 64
        %v1423 = vpop.permute.xlu0 %1422
        %v1425 = vadd.f32 %v1365, %v1423
        %v1426 = vtanh.pop %v1425
        %1428 = vrot.lane.b32.xlu0 %v1426, 64
        %v1429 = vpop.permute.xlu0 %1428
        %v1431 = vsub.f32 %v1372, %v1429
        %v1433 = vperm.slane %v1431, 0
        %1434 = vrot.lane.b32.xlu0 %v1433, 32
        %v1435 = vpop.permute.xlu0 %1434
        %v1437 = vmul.f32 %v1415, %v1435
        %1439 = vrot.lane.b32.xlu0 %v1437, 32
        %v1440 = vpop.permute.xlu0 %1439
        %v1442 = vadd.f32 %v1426, %v1440
        %1444 = vrot.lane.b32.xlu0 %v1442, 64
        %v1445 = vpop.permute.xlu0 %1444
        %v1446 = vsel %vm1279, %v1445, 0
        %1448 = vmatpush.msra.mxu0 0.0
        %1449 = vmatpush.msra.mxu0 0.0
        %1450 = vmatpush.msra.mxu0 0.0
        %1451 = vmatpush.msra.mxu0 0.0
        %1452 = vmatpush.msra.mxu0 0.0
        %1453 = vmatpush.msra.mxu0 0.0
        %1454 = vmatpush.msra.mxu0 0.0
        %1455 = vmatpush.msra.mxu0 0.0
        %1456 = vmatpush.msra.mxu0 0.0
        %1457 = vmatpush.msra.mxu0 0.0
        %1458 = vmatpush.msra.mxu0 0.0
        %1459 = vmatpush.msra.mxu0 0.0
        %1460 = vmatpush.msra.mxu0 %v1370
        %1461 = vmatpush.msra.mxu0 %v1369
        %1462 = vmatpush.msra.mxu0 %v1368
        %1463 = vmatpush.msra.mxu0 %v1367
        %1464 = vmatmul.f32.gmra.mxu0 %v1446
        %v1465 = vpop.f32.mrf.mxu0
        %v1466 = vadd.f32 %v1371, %v1465
        %1467 = vdwg.mxu0
        %v1469 = vrot.slane %v1466, 7
        %v1471 = vadd.f32 %v1365, %v1469
        %v1472 = vxor.u32 %v1471, 2147483648
        %v1473 = vmul.f32 %v1472, 1.442695
        %v1474 = vpow.pop %v1473
        %v1475 = vadd.f32 %v1474, 1.0
        %v1476 = vrcp.pop %v1475
        %v1477 = vmul.f32 %v1475, %v1476
        %v1478 = vsub.f32 1.0, %v1477
        %v1479 = vmul.f32 %v1476, %v1478
        %v1480 = vadd.f32 %v1476, %v1479
        %vm1481 = vweird.f32 %v1475
        %vm1482 = vweird.f32 %v1476
        %vm1483 = vmor %vm1481, %vm1482
        %v1484 = vsel %vm1483, %v1476, %v1480
        %v1485 = vand.u32 2147483647, %v1475
        %vm1486 = vcmp.eq.f32.partialorder %v1485, 8.507059e+37
        %v1487 = vand.u32 %v1475, 2147483648
        %v1488 = vor.u32 1.1754944e-38, %v1487
        %v1489 = vsel %vm1486, %v1488, %v1484
        %v1490 = vmul.f32 1.0, %v1489
        %1491 = vrot.lane.b32.xlu0 %v1469, 64
        %v1492 = vpop.permute.xlu0 %1491
        %v1494 = vmul.f32 %v1490, %v1492
        %1496 = vrot.lane.b32.xlu0 %v1494, 64
        %v1497 = vpop.permute.xlu0 %1496
        %v1499 = vadd.f32 %v1365, %v1497
        %v1500 = vtanh.pop %v1499
        %v1502 = vrot.slane %v1500, 1
        %v1504 = vsub.f32 %v1442, %v1502
        %v1506 = vrot.slane %v1504, 7
        %1507 = vrot.lane.b32.xlu0 %v1506, 96
        %v1508 = vpop.permute.xlu0 %1507
        %v1510 = vmul.f32 %v1490, %v1508
        %1512 = vrot.lane.b32.xlu0 %v1510, 32
        %v1513 = vpop.permute.xlu0 %1512
        %v1515 = vadd.f32 %v1500, %v1513
        %v1517 = vrot.slane %v1515, 1
        %1518 = vrot.lane.b32.xlu0 %v1517, 64
        %v1519 = vpop.permute.xlu0 %1518
        %v1520 = vsel %vm1279, %v1519, 0
        %1522 = vmatpush.msra.mxu0 0.0
        %1523 = vmatpush.msra.mxu0 0.0
        %1524 = vmatpush.msra.mxu0 0.0
        %1525 = vmatpush.msra.mxu0 0.0
        %1526 = vmatpush.msra.mxu0 0.0
        %1527 = vmatpush.msra.mxu0 0.0
        %1528 = vmatpush.msra.mxu0 0.0
        %1529 = vmatpush.msra.mxu0 0.0
        %1530 = vmatpush.msra.mxu0 0.0
        %1531 = vmatpush.msra.mxu0 0.0
        %1532 = vmatpush.msra.mxu0 0.0
        %1533 = vmatpush.msra.mxu0 0.0
        %1534 = vmatpush.msra.mxu0 %v1370
        %1535 = vmatpush.msra.mxu0 %v1369
        %1536 = vmatpush.msra.mxu0 %v1368
        %1537 = vmatpush.msra.mxu0 %v1367
        %1538 = vmatmul.f32.gmra.mxu0 %v1520
        %v1539 = vpop.f32.mrf.mxu0
        %v1540 = vadd.f32 %v1371, %v1539
        %1541 = vdwg.mxu0
        %v1543 = vrot.slane %v1540, 6
        %v1545 = vadd.f32 %v1365, %v1543
        %v1546 = vxor.u32 %v1545, 2147483648
        %v1547 = vmul.f32 %v1546, 1.442695
        %v1548 = vpow.pop %v1547
        %v1549 = vadd.f32 %v1548, 1.0
        %v1550 = vrcp.pop %v1549
        %v1551 = vmul.f32 %v1549, %v1550
        %v1552 = vsub.f32 1.0, %v1551
        %v1553 = vmul.f32 %v1550, %v1552
        %v1554 = vadd.f32 %v1550, %v1553
        %vm1555 = vweird.f32 %v1549
        %vm1556 = vweird.f32 %v1550
        %vm1557 = vmor %vm1555, %vm1556
        %v1558 = vsel %vm1557, %v1550, %v1554
        %v1559 = vand.u32 2147483647, %v1549
        %vm1560 = vcmp.eq.f32.partialorder %v1559, 8.507059e+37
        %v1561 = vand.u32 %v1549, 2147483648
        %v1562 = vor.u32 1.1754944e-38, %v1561
        %v1563 = vsel %vm1560, %v1562, %v1558
        %v1564 = vmul.f32 1.0, %v1563
        %1565 = vrot.lane.b32.xlu0 %v1543, 64
        %v1566 = vpop.permute.xlu0 %1565
        %v1568 = vmul.f32 %v1564, %v1566
        %1570 = vrot.lane.b32.xlu0 %v1568, 64
        %v1571 = vpop.permute.xlu0 %1570
        %v1573 = vadd.f32 %v1365, %v1571
        %v1574 = vtanh.pop %v1573
        %v1576 = vrot.slane %v1574, 1
        %v1578 = vsub.f32 %v1515, %v1576
        %v1580 = vrot.slane %v1578, 7
        %1581 = vrot.lane.b32.xlu0 %v1580, 96
        %v1582 = vpop.permute.xlu0 %1581
        %v1584 = vmul.f32 %v1564, %v1582
        %1586 = vrot.lane.b32.xlu0 %v1584, 32
        %v1587 = vpop.permute.xlu0 %1586
        %v1589 = vadd.f32 %v1574, %v1587
        %v1591 = vrot.slane %v1589, 2
        %1592 = vrot.lane.b32.xlu0 %v1591, 64
        %v1593 = vpop.permute.xlu0 %1592
        %v1594 = vsel %vm1279, %v1593, 0
        %1596 = vmatpush.msra.mxu0 0.0
        %1597 = vmatpush.msra.mxu0 0.0
        %1598 = vmatpush.msra.mxu0 0.0
        %1599 = vmatpush.msra.mxu0 0.0
        %1600 = vmatpush.msra.mxu0 0.0
        %1601 = vmatpush.msra.mxu0 0.0
        %1602 = vmatpush.msra.mxu0 0.0
        %1603 = vmatpush.msra.mxu0 0.0
        %1604 = vmatpush.msra.mxu0 0.0
        %1605 = vmatpush.msra.mxu0 0.0
        %1606 = vmatpush.msra.mxu0 0.0
        %1607 = vmatpush.msra.mxu0 0.0
        %1608 = vmatpush.msra.mxu0 %v1370
        %1609 = vmatpush.msra.mxu0 %v1369
        %1610 = vmatpush.msra.mxu0 %v1368
        %1611 = vmatpush.msra.mxu0 %v1367
        %1612 = vmatmul.f32.gmra.mxu0 %v1594
        %v1613 = vpop.f32.mrf.mxu0
        %v1614 = vadd.f32 %v1371, %v1613
        %1615 = vdwg.mxu0
        %v1617 = vrot.slane %v1614, 5
        %v1619 = vadd.f32 %v1365, %v1617
        %v1620 = vxor.u32 %v1619, 2147483648
        %v1621 = vmul.f32 %v1620, 1.442695
        %v1622 = vpow.pop %v1621
        %v1623 = vadd.f32 %v1622, 1.0
        %v1624 = vrcp.pop %v1623
        %v1625 = vmul.f32 %v1623, %v1624
        %v1626 = vsub.f32 1.0, %v1625
        %v1627 = vmul.f32 %v1624, %v1626
        %v1628 = vadd.f32 %v1624, %v1627
        %vm1629 = vweird.f32 %v1623
        %vm1630 = vweird.f32 %v1624
        %vm1631 = vmor %vm1629, %vm1630
        %v1632 = vsel %vm1631, %v1624, %v1628
        %v1633 = vand.u32 2147483647, %v1623
        %vm1634 = vcmp.eq.f32.partialorder %v1633, 8.507059e+37
        %v1635 = vand.u32 %v1623, 2147483648
        %v1636 = vor.u32 1.1754944e-38, %v1635
        %v1637 = vsel %vm1634, %v1636, %v1632
        %v1638 = vmul.f32 1.0, %v1637
        %1639 = vrot.lane.b32.xlu0 %v1617, 64
        %v1640 = vpop.permute.xlu0 %1639
        %v1642 = vmul.f32 %v1638, %v1640
        %1644 = vrot.lane.b32.xlu0 %v1642, 64
        %v1645 = vpop.permute.xlu0 %1644
        %v1647 = vadd.f32 %v1365, %v1645
        %v1648 = vtanh.pop %v1647
        %v1650 = vrot.slane %v1648, 1
        %v1652 = vsub.f32 %v1589, %v1650
        %v1654 = vrot.slane %v1652, 7
        %1655 = vrot.lane.b32.xlu0 %v1654, 96
        %v1656 = vpop.permute.xlu0 %1655
        %v1658 = vmul.f32 %v1638, %v1656
        %1660 = vrot.lane.b32.xlu0 %v1658, 32
        %v1661 = vpop.permute.xlu0 %1660
        %v1663 = vadd.f32 %v1648, %v1661
        %v1665 = vrot.slane %v1663, 3
        %1666 = vrot.lane.b32.xlu0 %v1665, 64
        %v1667 = vpop.permute.xlu0 %1666
        %v1668 = vsel %vm1279, %v1667, 0
        %1670 = vmatpush.msra.mxu0 0.0
        %1671 = vmatpush.msra.mxu0 0.0
        %1672 = vmatpush.msra.mxu0 0.0
        %1673 = vmatpush.msra.mxu0 0.0
        %1674 = vmatpush.msra.mxu0 0.0
        %1675 = vmatpush.msra.mxu0 0.0
        %1676 = vmatpush.msra.mxu0 0.0
        %1677 = vmatpush.msra.mxu0 0.0
        %1678 = vmatpush.msra.mxu0 0.0
        %1679 = vmatpush.msra.mxu0 0.0
        %1680 = vmatpush.msra.mxu0 0.0
        %1681 = vmatpush.msra.mxu0 0.0
        %1682 = vmatpush.msra.mxu0 %v1370
        %1683 = vmatpush.msra.mxu0 %v1369
        %1684 = vmatpush.msra.mxu0 %v1368
        %1685 = vmatpush.msra.mxu0 %v1367
        %1686 = vmatmul.f32.gmra.mxu0 %v1668
        %v1687 = vpop.f32.mrf.mxu0
        %v1688 = vadd.f32 %v1371, %v1687
        %1689 = vdwg.mxu0
        %v1691 = vrot.slane %v1688, 4
        %v1693 = vadd.f32 %v1365, %v1691
        %v1694 = vxor.u32 %v1693, 2147483648
        %v1695 = vmul.f32 %v1694, 1.442695
        %v1696 = vpow.pop %v1695
        %v1697 = vadd.f32 %v1696, 1.0
        %v1698 = vrcp.pop %v1697
        %v1699 = vmul.f32 %v1697, %v1698
        %v1700 = vsub.f32 1.0, %v1699
        %v1701 = vmul.f32 %v1698, %v1700
        %v1702 = vadd.f32 %v1698, %v1701
        %vm1703 = vweird.f32 %v1697
        %vm1704 = vweird.f32 %v1698
        %vm1705 = vmor %vm1703, %vm1704
        %v1706 = vsel %vm1705, %v1698, %v1702
        %v1707 = vand.u32 2147483647, %v1697
        %vm1708 = vcmp.eq.f32.partialorder %v1707, 8.507059e+37
        %v1709 = vand.u32 %v1697, 2147483648
        %v1710 = vor.u32 1.1754944e-38, %v1709
        %v1711 = vsel %vm1708, %v1710, %v1706
        %v1712 = vmul.f32 1.0, %v1711
        %1713 = vrot.lane.b32.xlu0 %v1691, 64
        %v1714 = vpop.permute.xlu0 %1713
        %v1716 = vmul.f32 %v1712, %v1714
        %1718 = vrot.lane.b32.xlu0 %v1716, 64
        %v1719 = vpop.permute.xlu0 %1718
        %v1721 = vadd.f32 %v1365, %v1719
        %v1722 = vtanh.pop %v1721
        %v1724 = vrot.slane %v1722, 1
        %v1726 = vsub.f32 %v1663, %v1724
        %v1728 = vrot.slane %v1726, 7
        %1729 = vrot.lane.b32.xlu0 %v1728, 96
        %v1730 = vpop.permute.xlu0 %1729
        %v1732 = vmul.f32 %v1712, %v1730
        %1734 = vrot.lane.b32.xlu0 %v1732, 32
        %v1735 = vpop.permute.xlu0 %1734
        %v1737 = vadd.f32 %v1722, %v1735
        %v1739 = vrot.slane %v1737, 4
        %1740 = vrot.lane.b32.xlu0 %v1739, 64
        %v1741 = vpop.permute.xlu0 %1740
        %v1742 = vsel %vm1279, %v1741, 0
        %1744 = vmatpush.msra.mxu0 0.0
        %1745 = vmatpush.msra.mxu0 0.0
        %1746 = vmatpush.msra.mxu0 0.0
        %1747 = vmatpush.msra.mxu0 0.0
        %1748 = vmatpush.msra.mxu0 0.0
        %1749 = vmatpush.msra.mxu0 0.0
        %1750 = vmatpush.msra.mxu0 0.0
        %1751 = vmatpush.msra.mxu0 0.0
        %1752 = vmatpush.msra.mxu0 0.0
        %1753 = vmatpush.msra.mxu0 0.0
        %1754 = vmatpush.msra.mxu0 0.0
        %1755 = vmatpush.msra.mxu0 0.0
        %1756 = vmatpush.msra.mxu0 %v1370
        %1757 = vmatpush.msra.mxu0 %v1369
        %1758 = vmatpush.msra.mxu0 %v1368
        %1759 = vmatpush.msra.mxu0 %v1367
        %1760 = vmatmul.f32.gmra.mxu0 %v1742
        %v1761 = vpop.f32.mrf.mxu0
        %v1762 = vadd.f32 %v1371, %v1761
        %1763 = vdwg.mxu0
        %v1765 = vrot.slane %v1762, 3
        %v1767 = vadd.f32 %v1365, %v1765
        %v1768 = vxor.u32 %v1767, 2147483648
        %v1769 = vmul.f32 %v1768, 1.442695
        %v1770 = vpow.pop %v1769
        %v1771 = vadd.f32 %v1770, 1.0
        %v1772 = vrcp.pop %v1771
        %v1773 = vmul.f32 %v1771, %v1772
        %v1774 = vsub.f32 1.0, %v1773
        %v1775 = vmul.f32 %v1772, %v1774
        %v1776 = vadd.f32 %v1772, %v1775
        %vm1777 = vweird.f32 %v1771
        %vm1778 = vweird.f32 %v1772
        %vm1779 = vmor %vm1777, %vm1778
        %v1780 = vsel %vm1779, %v1772, %v1776
        %v1781 = vand.u32 2147483647, %v1771
        %vm1782 = vcmp.eq.f32.partialorder %v1781, 8.507059e+37
        %v1783 = vand.u32 %v1771, 2147483648
        %v1784 = vor.u32 1.1754944e-38, %v1783
        %v1785 = vsel %vm1782, %v1784, %v1780
        %v1786 = vmul.f32 1.0, %v1785
        %1787 = vrot.lane.b32.xlu0 %v1765, 64
        %v1788 = vpop.permute.xlu0 %1787
        %v1790 = vmul.f32 %v1786, %v1788
        %1792 = vrot.lane.b32.xlu0 %v1790, 64
        %v1793 = vpop.permute.xlu0 %1792
        %v1795 = vadd.f32 %v1365, %v1793
        %v1796 = vtanh.pop %v1795
        %v1798 = vrot.slane %v1796, 1
        %v1800 = vsub.f32 %v1737, %v1798
        %v1802 = vrot.slane %v1800, 7
        %1803 = vrot.lane.b32.xlu0 %v1802, 96
        %v1804 = vpop.permute.xlu0 %1803
        %v1806 = vmul.f32 %v1786, %v1804
        %1808 = vrot.lane.b32.xlu0 %v1806, 32
        %v1809 = vpop.permute.xlu0 %1808
        %v1811 = vadd.f32 %v1796, %v1809
        %v1813 = vrot.slane %v1811, 5
        %1814 = vrot.lane.b32.xlu0 %v1813, 64
        %v1815 = vpop.permute.xlu0 %1814
        %v1816 = vsel %vm1279, %v1815, 0
        %1818 = vmatpush.msra.mxu0 0.0
        %1819 = vmatpush.msra.mxu0 0.0
        %1820 = vmatpush.msra.mxu0 0.0
        %1821 = vmatpush.msra.mxu0 0.0
        %1822 = vmatpush.msra.mxu0 0.0
        %1823 = vmatpush.msra.mxu0 0.0
        %1824 = vmatpush.msra.mxu0 0.0
        %1825 = vmatpush.msra.mxu0 0.0
        %1826 = vmatpush.msra.mxu0 0.0
        %1827 = vmatpush.msra.mxu0 0.0
        %1828 = vmatpush.msra.mxu0 0.0
        %1829 = vmatpush.msra.mxu0 0.0
        %1830 = vmatpush.msra.mxu0 %v1370
        %1831 = vmatpush.msra.mxu0 %v1369
        %1832 = vmatpush.msra.mxu0 %v1368
        %1833 = vmatpush.msra.mxu0 %v1367
        %1834 = vmatmul.f32.gmra.mxu0 %v1816
        %v1835 = vpop.f32.mrf.mxu0
        %v1836 = vadd.f32 %v1371, %v1835
        %1837 = vdwg.mxu0
        %v1839 = vrot.slane %v1836, 2
        %v1841 = vadd.f32 %v1365, %v1839
        %v1842 = vxor.u32 %v1841, 2147483648
        %v1843 = vmul.f32 %v1842, 1.442695
        %v1844 = vpow.pop %v1843
        %v1845 = vadd.f32 %v1844, 1.0
        %v1846 = vrcp.pop %v1845
        %v1847 = vmul.f32 %v1845, %v1846
        %v1848 = vsub.f32 1.0, %v1847
        %v1849 = vmul.f32 %v1846, %v1848
        %v1850 = vadd.f32 %v1846, %v1849
        %vm1851 = vweird.f32 %v1845
        %vm1852 = vweird.f32 %v1846
        %vm1853 = vmor %vm1851, %vm1852
        %v1854 = vsel %vm1853, %v1846, %v1850
        %v1855 = vand.u32 2147483647, %v1845
        %vm1856 = vcmp.eq.f32.partialorder %v1855, 8.507059e+37
        %v1857 = vand.u32 %v1845, 2147483648
        %v1858 = vor.u32 1.1754944e-38, %v1857
        %v1859 = vsel %vm1856, %v1858, %v1854
        %v1860 = vmul.f32 1.0, %v1859
        %1861 = vrot.lane.b32.xlu0 %v1839, 64
        %v1862 = vpop.permute.xlu0 %1861
        %v1864 = vmul.f32 %v1860, %v1862
        %1866 = vrot.lane.b32.xlu0 %v1864, 64
        %v1867 = vpop.permute.xlu0 %1866
        %v1869 = vadd.f32 %v1365, %v1867
        %v1870 = vtanh.pop %v1869
        %v1872 = vrot.slane %v1870, 1
        %v1874 = vsub.f32 %v1811, %v1872
        %v1876 = vrot.slane %v1874, 7
        %1877 = vrot.lane.b32.xlu0 %v1876, 96
        %v1878 = vpop.permute.xlu0 %1877
        %v1880 = vmul.f32 %v1860, %v1878
        %1882 = vrot.lane.b32.xlu0 %v1880, 32
        %v1883 = vpop.permute.xlu0 %1882
        %v1885 = vadd.f32 %v1870, %v1883
        %v1887 = vrot.slane %v1885, 6
        %1888 = vrot.lane.b32.xlu0 %v1887, 64
        %v1889 = vpop.permute.xlu0 %1888
        %v1890 = vsel %vm1279, %v1889, 0
        %1892 = vmatpush.msra.mxu0 0.0
        %1893 = vmatpush.msra.mxu0 0.0
        %1894 = vmatpush.msra.mxu0 0.0
        %1895 = vmatpush.msra.mxu0 0.0
        %1896 = vmatpush.msra.mxu0 0.0
        %1897 = vmatpush.msra.mxu0 0.0
        %1898 = vmatpush.msra.mxu0 0.0
        %1899 = vmatpush.msra.mxu0 0.0
        %1900 = vmatpush.msra.mxu0 0.0
        %1901 = vmatpush.msra.mxu0 0.0
        %1902 = vmatpush.msra.mxu0 0.0
        %1903 = vmatpush.msra.mxu0 0.0
        %1904 = vmatpush.msra.mxu0 %v1370
        %1905 = vmatpush.msra.mxu0 %v1369
        %1906 = vmatpush.msra.mxu0 %v1368
        %1907 = vmatpush.msra.mxu0 %v1367
        %1908 = vmatmul.f32.gmra.mxu0 %v1890
        %v1909 = vpop.f32.mrf.mxu0
        %v1910 = vadd.f32 %v1371, %v1909
        %1911 = vdwg.mxu0
        %v1913 = vrot.slane %v1910, 1
        %v1915 = vadd.f32 %v1365, %v1913
        %v1916 = vxor.u32 %v1915, 2147483648
        %v1917 = vmul.f32 %v1916, 1.442695
        %v1918 = vpow.pop %v1917
        %v1919 = vadd.f32 %v1918, 1.0
        %v1920 = vrcp.pop %v1919
        %v1921 = vmul.f32 %v1919, %v1920
        %v1922 = vsub.f32 1.0, %v1921
        %v1923 = vmul.f32 %v1920, %v1922
        %v1924 = vadd.f32 %v1920, %v1923
        %vm1925 = vweird.f32 %v1919
        %vm1926 = vweird.f32 %v1920
        %vm1927 = vmor %vm1925, %vm1926
        %v1928 = vsel %vm1927, %v1920, %v1924
        %v1929 = vand.u32 2147483647, %v1919
        %vm1930 = vcmp.eq.f32.partialorder %v1929, 8.507059e+37
        %v1931 = vand.u32 %v1919, 2147483648
        %v1932 = vor.u32 1.1754944e-38, %v1931
        %v1933 = vsel %vm1930, %v1932, %v1928
        %v1934 = vmul.f32 1.0, %v1933
        %1935 = vrot.lane.b32.xlu0 %v1913, 64
        %v1936 = vpop.permute.xlu0 %1935
        %v1938 = vmul.f32 %v1934, %v1936
        %1940 = vrot.lane.b32.xlu0 %v1938, 64
        %v1941 = vpop.permute.xlu0 %1940
        %v1943 = vadd.f32 %v1365, %v1941
        %v1944 = vtanh.pop %v1943
        %v1946 = vrot.slane %v1944, 1
        %v1948 = vsub.f32 %v1885, %v1946
        %v1950 = vrot.slane %v1948, 7
        %1951 = vrot.lane.b32.xlu0 %v1950, 96
        %v1952 = vpop.permute.xlu0 %1951
        %v1954 = vmul.f32 %v1934, %v1952
        %1956 = vrot.lane.b32.xlu0 %v1954, 32
        %v1957 = vpop.permute.xlu0 %1956
        %v1959 = vadd.f32 %v1944, %v1957
        %1961 = vrot.lane.b32.xlu0 %v1959, 64
        %v1962 = vpop.permute.xlu0 %1961
        %vm1964 = vcmask 261127
        %1965 = vst.msk [vmem:[%s627 - $0x7] sm:$0x80] %vm1964, %v1962
        %vm1966 = vcmask 1040384
        %v1967 = vsel %vm1966, %v1442, %v1515
        %vm1968 = vcmask 1041408
        %v1969 = vsel %vm1968, %v1967, %v1589
        %vm1970 = vcmask 1042432
        %v1971 = vsel %vm1970, %v1969, %v1663
        %vm1972 = vcmask 1043456
        %v1973 = vsel %vm1972, %v1971, %v1737
        %vm1974 = vcmask 1044480
        %v1975 = vsel %vm1974, %v1973, %v1811
        %vm1976 = vcmask 1045504
        %v1977 = vsel %vm1976, %v1975, %v1885
        %vm1978 = vcmask 1046528
        %v1979 = vsel %vm1978, %v1977, %v1959
        %v1980 = vld [vmem:[%s15] sm:$0xff]
        %v1981 = vld [vmem:[%s15 + $0x8] sm:$0xff]
        %v1982 = vld [vmem:[%s15 + $0x10] sm:$0xff]
        %v1983 = vld [vmem:[%s15 + $0x18] sm:$0xff]
        %v1984 = vld [vmem:[%s16] sm:$0x1]
        %v1986 = vperm.slane %v1984, 0
        %1989 = vrot.lane.b32.xlu0 %v1979, 64
        %v1990 = vpop.permute.xlu0 %1989
        %v1991 = vsel %vm1279, %v1990, 0
        %1993 = vmatpush.msra.mxu0 0.0
        %1994 = vmatpush.msra.mxu0 0.0
        %1995 = vmatpush.msra.mxu0 0.0
        %1996 = vmatpush.msra.mxu0 0.0
        %1997 = vmatpush.msra.mxu0 0.0
        %1998 = vmatpush.msra.mxu0 0.0
        %1999 = vmatpush.msra.mxu0 0.0
        %2000 = vmatpush.msra.mxu0 0.0
        %2001 = vmatpush.msra.mxu0 0.0
        %2002 = vmatpush.msra.mxu0 0.0
        %2003 = vmatpush.msra.mxu0 0.0
        %2004 = vmatpush.msra.mxu0 0.0
        %2005 = vmatpush.msra.mxu0 %v1983
        %2006 = vmatpush.msra.mxu0 %v1982
        %2007 = vmatpush.msra.mxu0 %v1981
        %2008 = vmatpush.msra.mxu0 %v1980
        %2009 = vmatmul.f32.gmra.mxu0 %v1991
        %v2010 = vpop.f32.mrf.mxu0
        %v2011 = vadd.f32 %v1986, %v2010
        %2012 = vdwg.mxu0
        %2013 = vst [vmem:[%s638] sm:$0xff] %v2011
        %p2014 = scmp.lt.s32.totalorder %s35, 3
        %s2015 = scalar_select %p2014, %s35, 3
        %s2016 = smul.addr %s2015, 8
        %s2017 = scalar_lea.vmem %s18, %s2016
        %s2018 = sand.u32 %s457, 1
        %s2019 = scalar_lea.sflag [#allocation4], %s2018
        %s2020 = sand.u32 %s457, 1
        %s2021 = scalar_lea.vmem [#allocation5], %s2020
        // Predicated region
        $region97: #{dqn_gru_cnn_pallas_batched.1} parent=91 // pred_check
          %p2022 = pneg %p441
        $region98: #{dqn_gru_cnn_pallas_batched.1} parent=91 // pred_check_branch
          %2024 = sbr.rel (%p2022) target = $region100
        $region99: #{dqn_gru_cnn_pallas_batched.1} parent=91 // pred_region
          _
        $region100: #{dqn_gru_cnn_pallas_batched.1} parent=91 // pred_fallthru
          _
        // Predicated region
        $region101: #{dqn_gru_cnn_pallas_batched.1} parent=91 // pred_check
          %p2025 = pneg %p467
        $region102: #{dqn_gru_cnn_pallas_batched.1} parent=91 // pred_check_branch
          %2027 = sbr.rel (%p2025) target = $region104
        $region103: #{dqn_gru_cnn_pallas_batched.1} parent=91 // pred_region
          %2029 = vsyncadd %s2019, 0
          %s2030 = scalar_lea.hbm %s19, %s35
          %s2032 = sshll.u32 %s2021, 4
          %s2033 = int_to_ptr.vmem [resolvable:$true] %s2032
          %s2034 = sshll.u32 %s2030, 4
          %s2035 = int_to_ptr.hbm [resolvable:$true] %s2034
          %2037 = dma.vmem_to_hbm [thread:$0]  %s2033, 16, %s2035, %s2019
        $region104: #{dqn_gru_cnn_pallas_batched.1} parent=91 // pred_fallthru
          _
      $region92: #{dqn_gru_cnn_pallas_batched.1} parent=5 // pred_fallthru
        _
      %p2038 = scmp.le.s32.totalorder 2, %s30
      // Predicated region
      $region105: #{dqn_gru_cnn_pallas_batched.1} parent=5 // pred_check
        %p2039 = pneg %p2038
      $region106: #{dqn_gru_cnn_pallas_batched.1} parent=5 // pred_check_branch
        %2041 = sbr.rel (%p2039) target = $region108
      $region107: #{dqn_gru_cnn_pallas_batched.1} parent=5 // pred_region
        %s2042 = ssub.s32 %s30, 2
        // Predicated region
        $region109: #{dqn_gru_cnn_pallas_batched.1} parent=107 // pred_check
          %p2043 = pneg %p447
        $region110: #{dqn_gru_cnn_pallas_batched.1} parent=107 // pred_check_branch
          %2045 = sbr.rel (%p2043) target = $region112
        $region111: #{dqn_gru_cnn_pallas_batched.1} parent=107 // pred_region
          %p2046 = scmp.lt.s32.totalorder %s36, 3
          %s2047 = scalar_select %p2046, %s36, 3
          %s2048 = smul.addr %s2047, 8
          %s2049 = scalar_lea.vmem %s18, %s2048
        $region112: #{dqn_gru_cnn_pallas_batched.1} parent=107 // pred_fallthru
          _
        // Predicated region
        $region113: #{dqn_gru_cnn_pallas_batched.1} parent=107 // pred_check
          %p2050 = pneg %p473
        $region114: #{dqn_gru_cnn_pallas_batched.1} parent=107 // pred_check_branch
          %2052 = sbr.rel (%p2050) target = $region116
        $region115: #{dqn_gru_cnn_pallas_batched.1} parent=107 // pred_region
          %s2053 = sand.u32 %s458, 1
          %s2054 = scalar_lea.sflag [#allocation4], %s2053
          %s2055 = sand.u32 %s458, 1
          %s2056 = scalar_lea.vmem [#allocation5], %s2055
          %2058 = dma.done %s2054, 16
        $region116: #{dqn_gru_cnn_pallas_batched.1} parent=107 // pred_fallthru
          _
      $region108: #{dqn_gru_cnn_pallas_batched.1} parent=5 // pred_fallthru
        _
    $region6: #{dqn_gru_cnn_pallas_batched.1} parent=1 // loop_footer
      %s34 = sadd.s32 1, %s30
    $region7: #{dqn_gru_cnn_pallas_batched.1} parent=1 // loop_footer_branch
      %29 = sbr.rel target = $region3
    $region8: #{dqn_gru_cnn_pallas_batched.1} parent=1 // loop_exit
      _
    %2059 = vsyncpa [#allocation3], 1
    %s2060 = scalar_lea.sflag [#allocation3], 1
    %2061 = vsyncpa %s2060, 1
    %2062 = vsyncpa [#allocation4], 1
    %s2063 = scalar_lea.sflag [#allocation4], 1
    %2064 = vsyncpa %s2063, 1

</llo_original>
